<compile_context>
chip_gen: v6e
topology: v6e:2x2x1
jax: 0.10.0
libtpu: 0.0.40
codegen_flags: <defaults>
</compile_context>

<pallas_src>
import math
import functools

import jax
import jax.numpy as jnp
from jax import lax
from jax.experimental import pallas as pl
from jax.experimental.pallas import tpu as pltpu


MXU_DTYPE = jnp.bfloat16          # MXU inputs in bf16, accumulation in f32
LN_EPS = 1e-5                     # PyTorch LayerNorm default


def _default_vmem_limit():
    # size the scoped-VMEM budget per generation (v7x: 64 MiB/TC, v5e/v6e: 128 MiB)
    try:
        info = pltpu.get_tpu_info()
        cap = int(getattr(info, "vmem_capacity_bytes", 64 * 1024 * 1024))
        return min((cap * 3) // 4, 96 * 1024 * 1024)
    except Exception:
        return 48 * 1024 * 1024


VMEM_LIMIT_BYTES = _default_vmem_limit()


# ----------------------------- Pallas kernels ------------------------------

def _embed_pe_kernel(x_ref, w_ref, b_ref, pe_ref, o_ref):
    # x: (S, K) block of one batch element (f32); w: (K, D) bf16 weight;
    # pe: (S, D) shared across the batch grid via index_map.
    y = jnp.dot(x_ref[...].astype(MXU_DTYPE), w_ref[...],
                preferred_element_type=jnp.float32)          # (S, D) f32
    o_ref[...] = y + b_ref[...] + pe_ref[...]


def _encoder_stack_kernel(x_ref, wqkv_ref, bqkv_ref, wo_ref, bo_ref,
                          ln1g_ref, ln1b_ref, w1_ref, b1_ref,
                          w2_ref, b2_ref, ln2g_ref, ln2b_ref,
                          o_ref, h_scratch, *, nhead, head_dim, eps):
    # grid = (batch, layer).  One full post-norm TransformerEncoderLayer per (bi, li)
    # step; the running activation stays resident in VMEM scratch across the layer axis.
    li = pl.program_id(1)

    @pl.when(li == 0)
    def _():
        h_scratch[...] = x_ref[...]                          # fresh batch element

    x = h_scratch[...]                                       # (S, D) f32
    S, D = x.shape

    # --- fused QKV projection (one MXU matmul; weights already bf16) ---
    x_bf = x.astype(MXU_DTYPE)
    qkv = jnp.dot(x_bf, wqkv_ref[...],
                  preferred_element_type=jnp.float32) + bqkv_ref[...]   # (S, 3D) f32

    scale = 1.0 / math.sqrt(head_dim)
    qk_dims = (((1,), (1,)), ((), ()))                       # contract last dims, no .T

    # --- per-head attention; contexts concatenated, ONE full-K output projection ---
    # TODO(synk): for long sequences tile the KV axis flash-style (online softmax) to
    #             bound the (S, S) score tile; not needed at these sizes.
    # TODO(synk): at production sizes choose head_dim as a multiple of 128 so each
    #             head slice is a lane-aligned free view.
    ctx_heads = []
    for h in range(nhead):
        lo = h * head_dim
        hi = lo + head_dim
        q_h = (qkv[:, lo:hi] * scale).astype(MXU_DTYPE)      # scale folded into q
        k_h = qkv[:, D + lo:D + hi].astype(MXU_DTYPE)
        v_h = qkv[:, 2 * D + lo:2 * D + hi].astype(MXU_DTYPE)
        s = lax.dot_general(q_h, k_h, qk_dims,
                            preferred_element_type=jnp.float32)         # (S, S)
        m = jnp.max(s, axis=-1, keepdims=True)
        p = jnp.exp(s - m)
        p = p * pl.reciprocal(jnp.sum(p, axis=-1, keepdims=True), approx=True)
        ctx_heads.append(jnp.dot(p.astype(MXU_DTYPE), v_h,
                                 preferred_element_type=jnp.float32))   # (S, Dh)
    ctx = jnp.concatenate(ctx_heads, axis=-1)                # (S, D), head-merge
    attn_out = jnp.dot(ctx.astype(MXU_DTYPE), wo_ref[...],
                       preferred_element_type=jnp.float32) + bo_ref[...]

    # --- residual + LayerNorm1 (post-norm, biased variance like PyTorch) ---
    y1 = x + attn_out
    mu1 = jnp.mean(y1, axis=-1, keepdims=True)
    var1 = jnp.mean((y1 - mu1) * (y1 - mu1), axis=-1, keepdims=True)
    h1 = (y1 - mu1) * lax.rsqrt(var1 + eps) * ln1g_ref[...] + ln1b_ref[...]

    # --- feed-forward; (S, 4D) intermediate never leaves VMEM ---
    ff = jnp.dot(h1.astype(MXU_DTYPE), w1_ref[...],
                 preferred_element_type=jnp.float32) + b1_ref[...]
    ff = jnp.maximum(ff, 0.0)
    ff = jnp.dot(ff.astype(MXU_DTYPE), w2_ref[...],
                 preferred_element_type=jnp.float32) + b2_ref[...]

    # --- residual + LayerNorm2 ---
    y2 = h1 + ff
    mu2 = jnp.mean(y2, axis=-1, keepdims=True)
    var2 = jnp.mean((y2 - mu2) * (y2 - mu2), axis=-1, keepdims=True)
    h2 = (y2 - mu2) * lax.rsqrt(var2 + eps) * ln2g_ref[...] + ln2b_ref[...]

    h_scratch[...] = h2                                      # carry to next layer

    @pl.when(li == pl.num_programs(1) - 1)
    def _():
        o_ref[...] = h2                                      # only final layer hits HBM


def _tiled_linear_kernel(x_ref, w_ref, b_ref, o_ref, acc_ref):
    # Canonical tiled matmul: K axis is the last ("arbitrary") grid dim.
    @pl.when(pl.program_id(2) == 0)
    def _():
        acc_ref[...] = jnp.zeros_like(acc_ref)
    acc_ref[...] += jnp.dot(x_ref[...].astype(MXU_DTYPE), w_ref[...],
                            preferred_element_type=jnp.float32)

    @pl.when(pl.program_id(2) == pl.num_programs(2) - 1)
    def _():
        o_ref[...] = (acc_ref[...] + b_ref[...]).astype(o_ref.dtype)


# ----------------------------- pallas_call wrappers -------------------------

def _bcast_spec(shape):
    # one full block, re-used across the whole grid (weights / biases shared per grid)
    return pl.BlockSpec(shape, lambda *_: (0,) * len(shape))


def pallas_embed_pe(src, w_bf16, b, pe):
    """out[b] = src[b] @ w + b + pe, grid over batch ('parallel')."""
    B, S, K = src.shape
    D = w_bf16.shape[1]
    return pl.pallas_call(
        _embed_pe_kernel,
        out_shape=jax.ShapeDtypeStruct((B, S, D), jnp.float32),
        grid=(B,),
        in_specs=[
            pl.BlockSpec((None, S, K), lambda bi: (bi, 0, 0)),
            _bcast_spec((K, D)),
            _bcast_spec((1, D)),
            _bcast_spec((S, D)),       # PE broadcast via index_map — never tiled to (B*S, D)
        ],
        out_specs=pl.BlockSpec((None, S, D), lambda bi: (bi, 0, 0)),
        compiler_params=pltpu.CompilerParams(
            dimension_semantics=("parallel",),
            vmem_limit_bytes=VMEM_LIMIT_BYTES),
    )(src, w_bf16, b, pe)


def pallas_encoder_stack(x, stack, *, nhead):
    """All encoder layers in one pallas_call: grid=(B, L), layer axis 'arbitrary'.

    Per-layer weights are stacked along axis 0 and indexed by the layer grid index so
    the pipeline prefetches layer l+1 weights while layer l computes; the activation is
    carried in a VMEM scratch and only written to HBM at the final layer.
    """
    B, S, D = x.shape
    L = stack['in_proj_w'].shape[0]
    d_ff = stack['ff1_w'].shape[2]
    Dh = D // nhead
    kernel = functools.partial(_encoder_stack_kernel,
                               nhead=nhead, head_dim=Dh, eps=LN_EPS)

    def wspec(shape):
        nd = len(shape)
        # squeeze the stacked layer axis; block index follows the layer grid index
        return pl.BlockSpec((None,) + tuple(shape[1:]),
                            lambda bi, li, _nd=nd: (li,) + (0,) * (_nd - 1))

    return pl.pallas_call(
        kernel,
        out_shape=jax.ShapeDtypeStruct((B, S, D), jnp.float32),
        grid=(B, L),
        in_specs=[
            pl.BlockSpec((None, S, D), lambda bi, li: (bi, 0, 0)),
            wspec((L, D, 3 * D)), wspec((L, 1, 3 * D)),
            wspec((L, D, D)),     wspec((L, 1, D)),
            wspec((L, 1, D)),     wspec((L, 1, D)),
            wspec((L, D, d_ff)),  wspec((L, 1, d_ff)),
            wspec((L, d_ff, D)),  wspec((L, 1, D)),
            wspec((L, 1, D)),     wspec((L, 1, D)),
        ],
        out_specs=pl.BlockSpec((None, S, D), lambda bi, li: (bi, 0, 0)),
        scratch_shapes=[pltpu.VMEM((S, D), jnp.float32)],
        compiler_params=pltpu.CompilerParams(
            dimension_semantics=("parallel", "arbitrary"),
            vmem_limit_bytes=VMEM_LIMIT_BYTES),
    )(x,
      stack['in_proj_w'], stack['in_proj_b'],
      stack['out_proj_w'], stack['out_proj_b'],
      stack['ln1_g'], stack['ln1_b'],
      stack['ff1_w'], stack['ff1_b'],
      stack['ff2_w'], stack['ff2_b'],
      stack['ln2_g'], stack['ln2_b'])


def pallas_tiled_linear(x, w_bf16, b, *, tm=256, tn=256, tk=512):
    """y = x @ w + b with the tiled/pipelined matmul pattern (clamped tiles for small shapes).

    TODO(synk): output N=input_dim is lane-sparse (<128); at production sizes reshape the
    wrapper-side output layout to present a lane-dense slab.
    """
    M, K = x.shape
    N = w_bf16.shape[1]
    tm, tn, tk = min(tm, M), min(tn, N), min(tk, K)
    grid = (pl.cdiv(M, tm), pl.cdiv(N, tn), pl.cdiv(K, tk))
    cost = pl.CostEstimate(flops=2 * M * K * N, transcendentals=0,
                           bytes_accessed=M * K * 4 + K * N * 2 + M * N * 4)
    return pl.pallas_call(
        _tiled_linear_kernel,
        out_shape=jax.ShapeDtypeStruct((M, N), jnp.float32),
        grid_spec=pltpu.PrefetchScalarGridSpec(
            num_scalar_prefetch=0,
            grid=grid,
            in_specs=[pl.BlockSpec((tm, tk), lambda i, j, k: (i, k)),
                      pl.BlockSpec((tk, tn), lambda i, j, k: (k, j)),
                      pl.BlockSpec((1, tn), lambda i, j, k: (0, j))],
            out_specs=pl.BlockSpec((tm, tn), lambda i, j, k: (i, j)),
            scratch_shapes=[pltpu.VMEM((tm, tn), jnp.float32)]),
        compiler_params=pltpu.CompilerParams(
            dimension_semantics=("parallel", "parallel", "arbitrary"),
            vmem_limit_bytes=VMEM_LIMIT_BYTES),
        cost_estimate=cost,
    )(x, w_bf16, b)


# ----------------------------- parameter setup ------------------------------

def make_positional_encoding(seq_len, d_model):
    position = jnp.arange(0, seq_len, dtype=jnp.float32)[:, None]
    div_term = jnp.exp(jnp.arange(0, d_model, 2, dtype=jnp.float32)
                       * (-math.log(10000.0) / d_model))
    pe = jnp.zeros((seq_len, d_model), dtype=jnp.float32)
    pe = pe.at[:, 0::2].set(jnp.sin(position * div_term))
    pe = pe.at[:, 1::2].set(jnp.cos(position * div_term))
    return pe  # (seq_len, d_model)


def init_params(key, input_dim, d_model, nhead, num_layers):
    d_ff = d_model * 4
    keys = jax.random.split(key, 2 + num_layers * 8)
    ki = iter(keys)

    def unif(k, shape, scale=0.1):
        return jax.random.uniform(k, shape, jnp.float32, -scale, scale)

    params = {
        'emb_w': unif(next(ki), (input_dim, d_model)),   # stored (in, out)
        'emb_b': jnp.zeros((d_model,), jnp.float32),
        'dec_w': unif(next(ki), (d_model, input_dim)),
        'dec_b': jnp.zeros((input_dim,), jnp.float32),
        'layers': [],
    }
    for _ in range(num_layers):
        params['layers'].append({
            'in_proj_w': unif(next(ki), (d_model, 3 * d_model)),
            'in_proj_b': unif(next(ki), (3 * d_model,), 0.01),
            'out_proj_w': unif(next(ki), (d_model, d_model)),
            'out_proj_b': unif(next(ki), (d_model,), 0.01),
            'ff1_w': unif(next(ki), (d_model, d_ff)),
            'ff1_b': unif(next(ki), (d_ff,), 0.01),
            'ff2_w': unif(next(ki), (d_ff, d_model)),
            'ff2_b': unif(next(ki), (d_model,), 0.01),
            'ln1_g': jnp.ones((d_model,), jnp.float32),
            'ln1_b': jnp.zeros((d_model,), jnp.float32),
            'ln2_g': jnp.ones((d_model,), jnp.float32),
            'ln2_b': jnp.zeros((d_model,), jnp.float32),
        })
    return params


def pack_params(params):
    """Stack per-layer params to (L, ...) and pre-cast weight matrices to bf16 (once,
    HBM-side).  Biases / LN params stay f32; accumulation stays f32 in-kernel."""
    D = params['emb_w'].shape[1]
    input_dim = params['emb_w'].shape[0]

    def stack(name, cast_bf16=False, row_bias=False):
        arrs = [lyr[name] for lyr in params['layers']]
        a = jnp.stack(arrs, axis=0)
        if row_bias:                       # (L, N) -> (L, 1, N)
            a = a.reshape(a.shape[0], 1, a.shape[1])
        if cast_bf16:
            a = a.astype(MXU_DTYPE)
        return a

    return {
        'emb_w': params['emb_w'].astype(MXU_DTYPE),
        'emb_b': params['emb_b'].reshape(1, D),
        'dec_w': params['dec_w'].astype(MXU_DTYPE),
        'dec_b': params['dec_b'].reshape(1, input_dim),
        'stack': {
            'in_proj_w': stack('in_proj_w', cast_bf16=True),
            'in_proj_b': stack('in_proj_b', row_bias=True),
            'out_proj_w': stack('out_proj_w', cast_bf16=True),
            'out_proj_b': stack('out_proj_b', row_bias=True),
            'ff1_w': stack('ff1_w', cast_bf16=True),
            'ff1_b': stack('ff1_b', row_bias=True),
            'ff2_w': stack('ff2_w', cast_bf16=True),
            'ff2_b': stack('ff2_b', row_bias=True),
            'ln1_g': stack('ln1_g', row_bias=True),
            'ln1_b': stack('ln1_b', row_bias=True),
            'ln2_g': stack('ln2_g', row_bias=True),
            'ln2_b': stack('ln2_b', row_bias=True),
        },
    }


# ----------------------------- forward pass ---------------------------------

def transformer_forward(src, packed, *, d_model, nhead):
    # src: (B, S, input_dim)
    B, S, input_dim = src.shape

    # embedding + positional encoding fused in one kernel; PE broadcast via index_map.
    pe = make_positional_encoding(S, d_model)                              # (S, D)
    h = pallas_embed_pe(src, packed['emb_w'], packed['emb_b'], pe)         # (B, S, D)

    # TODO(synk): dropout layers are identity here (eval-mode semantics); training-mode
    #             RNG dropout not implemented.
    # TODO(synk): for production sizes pick/pad d_model, d_ff, head_dim to multiples of
    #             128 (256 for contraction dims on v6e/v7x) so every matmul / store is
    #             lane-dense, and tile the S axis so each MXU matmul sees M >= 128 rows.
    h = pallas_encoder_stack(h, packed['stack'], nhead=nhead)              # one call, grid=(B, L)

    out = pallas_tiled_linear(h.reshape(B * S, d_model),
                              packed['dec_w'], packed['dec_b'])            # (B*S, input_dim)
    return out.reshape(B, S, input_dim)


# ----------------------------- main ------------------------------------------

if __name__ == "__main__":
    B, S = 2, 8
    input_dim, d_model, nhead, num_layers = 4, 32, 4, 2

    key = jax.random.PRNGKey(0)
    k_x, k_p = jax.random.split(key)

    src = jax.random.normal(k_x, (B, S, input_dim), dtype=jnp.float32)
    params = init_params(k_p, input_dim, d_model, nhead, num_layers)
    packed = pack_params(params)   # stack per-layer weights + bf16 cast, once (HBM side)

    fwd = jax.jit(functools.partial(transformer_forward, d_model=d_model, nhead=nhead))
    out = fwd(src, packed)
    jax.block_until_ready(out)

    assert out.shape == (B, S, input_dim)
    assert out.dtype == jnp.float32
    assert bool(jnp.all(jnp.isfinite(out)))
    print("KERNEL_OK")
</pallas_src>

<mosaic_0001>
module attributes {stable_mosaic.version = 11 : i64} {
  func.func @_embed_pe_kernel(%arg0: i32, %arg1: memref<1x8x4xf32, #tpu.memory_space<vmem>>, %arg2: memref<4x32xbf16, #tpu.memory_space<vmem>>, %arg3: memref<1x32xf32, #tpu.memory_space<vmem>>, %arg4: memref<8x32xf32, #tpu.memory_space<vmem>>, %arg5: memref<1x8x32xf32, #tpu.memory_space<vmem>>) attributes {dimension_semantics = [#tpu.dimension_semantics<parallel>], iteration_bounds = array<i64: 2>, scalar_prefetch = 0 : i64, scratch_operands = 0 : i64, tpu.core_type = #tpu.core_type<tc>, window_params = [{transform_indices = @transform_0, window_bounds = array<i64: 1, 8, 4>}, {pipeline_mode = #tpu.pipeline_mode<synchronous>, transform_indices = @transform_1, window_bounds = array<i64: 4, 32>}, {pipeline_mode = #tpu.pipeline_mode<synchronous>, transform_indices = @transform_2, window_bounds = array<i64: 1, 32>}, {pipeline_mode = #tpu.pipeline_mode<synchronous>, transform_indices = @transform_3, window_bounds = array<i64: 8, 32>}, {transform_indices = @transform_4, window_bounds = array<i64: 1, 8, 32>}]} {
    %c0 = arith.constant 0 : index
    %c0_0 = arith.constant 0 : index
    %c0_1 = arith.constant 0 : index
    %0 = vector.load %arg1[%c0, %c0_0, %c0_1] : memref<1x8x4xf32, #tpu.memory_space<vmem>>, vector<1x8x4xf32>
    %1 = vector.shape_cast %0 : vector<1x8x4xf32> to vector<8x4xf32>
    %2 = arith.truncf %1 : vector<8x4xf32> to vector<8x4xbf16>
    %c0_2 = arith.constant 0 : index
    %c0_3 = arith.constant 0 : index
    %3 = vector.load %arg2[%c0_2, %c0_3] : memref<4x32xbf16, #tpu.memory_space<vmem>>, vector<4x32xbf16>
    %cst = arith.constant dense<0.000000e+00> : vector<8x32xf32>
    %4 = tpu.matmul %2, %3, %cst {dimension_numbers = #tpu.dot_dimension_numbers<[1], [0], [0], [1], [0, 0, 1, 1], [], []>} : vector<8x4xbf16>, vector<4x32xbf16>, vector<8x32xf32> -> vector<8x32xf32>
    %c0_4 = arith.constant 0 : index
    %c0_5 = arith.constant 0 : index
    %5 = vector.load %arg3[%c0_4, %c0_5] : memref<1x32xf32, #tpu.memory_space<vmem>>, vector<1x32xf32>
    %6 = vector.broadcast %5 : vector<1x32xf32> to vector<8x32xf32>
    %7 = arith.addf %4, %6 : vector<8x32xf32>
    %c0_6 = arith.constant 0 : index
    %c0_7 = arith.constant 0 : index
    %8 = vector.load %arg4[%c0_6, %c0_7] : memref<8x32xf32, #tpu.memory_space<vmem>>, vector<8x32xf32>
    %9 = arith.addf %7, %8 : vector<8x32xf32>
    %c0_8 = arith.constant 0 : index
    %c0_9 = arith.constant 0 : index
    %c0_10 = arith.constant 0 : index
    %10 = vector.load %arg5[%c0_8, %c0_9, %c0_10] : memref<1x8x32xf32, #tpu.memory_space<vmem>>, vector<1x8x32xf32>
    %11 = vector.shape_cast %10 : vector<1x8x32xf32> to vector<8x32xf32>
    %12 = vector.shape_cast %9 : vector<8x32xf32> to vector<1x8x32xf32>
    tpu.vector_store %arg5[%c0_8, %c0_9, %c0_10], %12 {strides = array<i32>} : memref<1x8x32xf32, #tpu.memory_space<vmem>>, vector<1x8x32xf32>,
    return
  }
  func.func @transform_0(%arg0: i32) -> (i32, i32, i32) {
    %c0_i32 = arith.constant 0 : i32
    %c0_i32_0 = arith.constant 0 : i32
    %c0_i32_1 = arith.constant 0 : i32
    return %arg0, %c0_i32, %c0_i32_0 : i32, i32, i32
  }
  func.func @transform_1(%arg0: i32) -> (i32, i32) {
    %c0_i32 = arith.constant 0 : i32
    %c0_i32_0 = arith.constant 0 : i32
    %c0_i32_1 = arith.constant 0 : i32
    return %c0_i32, %c0_i32_0 : i32, i32
  }
  func.func @transform_2(%arg0: i32) -> (i32, i32) {
    %c0_i32 = arith.constant 0 : i32
    %c0_i32_0 = arith.constant 0 : i32
    %c0_i32_1 = arith.constant 0 : i32
    return %c0_i32, %c0_i32_0 : i32, i32
  }
  func.func @transform_3(%arg0: i32) -> (i32, i32) {
    %c0_i32 = arith.constant 0 : i32
    %c0_i32_0 = arith.constant 0 : i32
    %c0_i32_1 = arith.constant 0 : i32
    return %c0_i32, %c0_i32_0 : i32, i32
  }
  func.func @transform_4(%arg0: i32) -> (i32, i32, i32) {
    %c0_i32 = arith.constant 0 : i32
    %c0_i32_0 = arith.constant 0 : i32
    %c0_i32_1 = arith.constant 0 : i32
    return %arg0, %c0_i32, %c0_i32_0 : i32, i32, i32
  }
}

module attributes {stable_mosaic.version = 11 : i64} {
  func.func @_tiled_linear_kernel(%arg0: i32, %arg1: i32, %arg2: i32, %arg3: memref<16x32xf32, #tpu.memory_space<vmem>>, %arg4: memref<32x4xbf16, #tpu.memory_space<vmem>>, %arg5: memref<1x4xf32, #tpu.memory_space<vmem>>, %arg6: memref<16x4xf32, #tpu.memory_space<vmem>>, %arg7: memref<16x4xf32, #tpu.memory_space<vmem>>) attributes {dimension_semantics = [#tpu.dimension_semantics<parallel>, #tpu.dimension_semantics<parallel>, #tpu.dimension_semantics<arbitrary>], iteration_bounds = array<i64: 1, 1, 1>, scalar_prefetch = 0 : i64, scratch_operands = 1 : i64, tpu.core_type = #tpu.core_type<tc>, window_params = [{transform_indices = @transform_0, window_bounds = array<i64: 16, 32>}, {transform_indices = @transform_1, window_bounds = array<i64: 32, 4>}, {transform_indices = @transform_2, window_bounds = array<i64: 1, 4>}, {transform_indices = @transform_3, window_bounds = array<i64: 16, 4>}]} {
    %c0_i32 = arith.constant 0 : i32
    %0 = arith.cmpi eq, %arg2, %c0_i32 : i32
    %1 = arith.extui %0 : i1 to i32
    %c0_i32_0 = arith.constant 0 : i32
    %2 = arith.cmpi ne, %1, %c0_i32_0 : i32
    scf.if %2 {
      %cst_10 = arith.constant 0.000000e+00 : f32
      %13 = vector.broadcast %cst_10 : f32 to vector<16x4xf32>
      %c0_11 = arith.constant 0 : index
      %c0_12 = arith.constant 0 : index
      %14 = vector.load %arg7[%c0_11, %c0_12] : memref<16x4xf32, #tpu.memory_space<vmem>>, vector<16x4xf32>
      tpu.vector_store %arg7[%c0_11, %c0_12], %13 {strides = array<i32>} : memref<16x4xf32, #tpu.memory_space<vmem>>, vector<16x4xf32>,
    } else {
    }
    %c0 = arith.constant 0 : index
    %c0_1 = arith.constant 0 : index
    %3 = vector.load %arg7[%c0, %c0_1] : memref<16x4xf32, #tpu.memory_space<vmem>>, vector<16x4xf32>
    %c0_2 = arith.constant 0 : index
    %c0_3 = arith.constant 0 : index
    %4 = vector.load %arg3[%c0_2, %c0_3] : memref<16x32xf32, #tpu.memory_space<vmem>>, vector<16x32xf32>
    %5 = arith.truncf %4 : vector<16x32xf32> to vector<16x32xbf16>
    %c0_4 = arith.constant 0 : index
    %c0_5 = arith.constant 0 : index
    %6 = vector.load %arg4[%c0_4, %c0_5] : memref<32x4xbf16, #tpu.memory_space<vmem>>, vector<32x4xbf16>
    %cst = arith.constant dense<0.000000e+00> : vector<16x4xf32>
    %7 = tpu.matmul %5, %6, %cst {dimension_numbers = #tpu.dot_dimension_numbers<[1], [0], [0], [1], [0, 0, 1, 1], [], []>} : vector<16x32xbf16>, vector<32x4xbf16>, vector<16x4xf32> -> vector<16x4xf32>
    %8 = arith.addf %3, %7 : vector<16x4xf32>
    %c0_6 = arith.constant 0 : index
    %c0_7 = arith.constant 0 : index
    %9 = vector.load %arg7[%c0_6, %c0_7] : memref<16x4xf32, #tpu.memory_space<vmem>>, vector<16x4xf32>
    tpu.vector_store %arg7[%c0_6, %c0_7], %8 {strides = array<i32>} : memref<16x4xf32, #tpu.memory_space<vmem>>, vector<16x4xf32>,
    %c0_i32_8 = arith.constant 0 : i32
    %10 = arith.cmpi eq, %arg2, %c0_i32_8 : i32
    %11 = arith.extui %10 : i1 to i32
    %c0_i32_9 = arith.constant 0 : i32
    %12 = arith.cmpi ne, %11, %c0_i32_9 : i32
    scf.if %12 {
      %c0_10 = arith.constant 0 : index
      %c0_11 = arith.constant 0 : index
      %13 = vector.load %arg7[%c0_10, %c0_11] : memref<16x4xf32, #tpu.memory_space<vmem>>, vector<16x4xf32>
      %c0_12 = arith.constant 0 : index
      %c0_13 = arith.constant 0 : index
      %14 = vector.load %arg5[%c0_12, %c0_13] : memref<1x4xf32, #tpu.memory_space<vmem>>, vector<1x4xf32>
      %15 = vector.broadcast %14 : vector<1x4xf32> to vector<16x4xf32>
      %16 = arith.addf %13, %15 : vector<16x4xf32>
      %c0_14 = arith.constant 0 : index
      %c0_15 = arith.constant 0 : index
      %17 = vector.load %arg6[%c0_14, %c0_15] : memref<16x4xf32, #tpu.memory_space<vmem>>, vector<16x4xf32>
      tpu.vector_store %arg6[%c0_14, %c0_15], %16 {strides = array<i32>} : memref<16x4xf32, #tpu.memory_space<vmem>>, vector<16x4xf32>,
    } else {
    }
    return
  }
  func.func @transform_0(%arg0: i32, %arg1: i32, %arg2: i32) -> (i32, i32) {
    %c0_i32 = arith.constant 0 : i32
    return %arg0, %arg2 : i32, i32
  }
  func.func @transform_1(%arg0: i32, %arg1: i32, %arg2: i32) -> (i32, i32) {
    %c0_i32 = arith.constant 0 : i32
    return %arg2, %arg1 : i32, i32
  }
  func.func @transform_2(%arg0: i32, %arg1: i32, %arg2: i32) -> (i32, i32) {
    %c0_i32 = arith.constant 0 : i32
    %c0_i32_0 = arith.constant 0 : i32
    return %c0_i32, %arg1 : i32, i32
  }
  func.func @transform_3(%arg0: i32, %arg1: i32, %arg2: i32) -> (i32, i32) {
    %c0_i32 = arith.constant 0 : i32
    return %arg0, %arg1 : i32, i32
  }
}

module attributes {stable_mosaic.version = 11 : i64} {
  func.func @_encoder_stack_kernel(%arg0: i32, %arg1: i32, %arg2: memref<1x8x32xf32, #tpu.memory_space<vmem>>, %arg3: memref<1x32x96xbf16, #tpu.memory_space<vmem>>, %arg4: memref<1x1x96xf32, #tpu.memory_space<vmem>>, %arg5: memref<1x32x32xbf16, #tpu.memory_space<vmem>>, %arg6: memref<1x1x32xf32, #tpu.memory_space<vmem>>, %arg7: memref<1x1x32xf32, #tpu.memory_space<vmem>>, %arg8: memref<1x1x32xf32, #tpu.memory_space<vmem>>, %arg9: memref<1x32x128xbf16, #tpu.memory_space<vmem>>, %arg10: memref<1x1x128xf32, #tpu.memory_space<vmem>>, %arg11: memref<1x128x32xbf16, #tpu.memory_space<vmem>>, %arg12: memref<1x1x32xf32, #tpu.memory_space<vmem>>, %arg13: memref<1x1x32xf32, #tpu.memory_space<vmem>>, %arg14: memref<1x1x32xf32, #tpu.memory_space<vmem>>, %arg15: memref<1x8x32xf32, #tpu.memory_space<vmem>>, %arg16: memref<8x32xf32, #tpu.memory_space<vmem>>) attributes {dimension_semantics = [#tpu.dimension_semantics<parallel>, #tpu.dimension_semantics<arbitrary>], iteration_bounds = array<i64: 2, 2>, scalar_prefetch = 0 : i64, scratch_operands = 1 : i64, tpu.core_type = #tpu.core_type<tc>, window_params = [{transform_indices = @transform_0, window_bounds = array<i64: 1, 8, 32>}, {transform_indices = @transform_1, window_bounds = array<i64: 1, 32, 96>}, {transform_indices = @transform_2, window_bounds = array<i64: 1, 1, 96>}, {transform_indices = @transform_3, window_bounds = array<i64: 1, 32, 32>}, {transform_indices = @transform_4, window_bounds = array<i64: 1, 1, 32>}, {transform_indices = @transform_5, window_bounds = array<i64: 1, 1, 32>}, {transform_indices = @transform_6, window_bounds = array<i64: 1, 1, 32>}, {transform_indices = @transform_7, window_bounds = array<i64: 1, 32, 128>}, {transform_indices = @transform_8, window_bounds = array<i64: 1, 1, 128>}, {transform_indices = @transform_9, window_bounds = array<i64: 1, 128, 32>}, {transform_indices = @transform_10, window_bounds = array<i64: 1, 1, 32>}, {transform_indices = @transform_11, window_bounds = array<i64: 1, 1, 32>}, {transform_indices = @transform_12, window_bounds = array<i64: 1, 1, 32>}, {transform_indices = @transform_13, window_bounds = array<i64: 1, 8, 32>}]} {
    %c0_i32 = arith.constant 0 : i32
    %0 = arith.cmpi eq, %arg1, %c0_i32 : i32
    %1 = arith.extui %0 : i1 to i32
    %c0_i32_0 = arith.constant 0 : i32
    %2 = arith.cmpi ne, %1, %c0_i32_0 : i32
    scf.if %2 {
      %c0_75 = arith.constant 0 : index
      %c0_76 = arith.constant 0 : index
      %c0_77 = arith.constant 0 : index
      %185 = vector.load %arg2[%c0_75, %c0_76, %c0_77] : memref<1x8x32xf32, #tpu.memory_space<vmem>>, vector<1x8x32xf32>
      %186 = vector.shape_cast %185 : vector<1x8x32xf32> to vector<8x32xf32>
      %c0_78 = arith.constant 0 : index
      %c0_79 = arith.constant 0 : index
      %187 = vector.load %arg16[%c0_78, %c0_79] : memref<8x32xf32, #tpu.memory_space<vmem>>, vector<8x32xf32>
      tpu.vector_store %arg16[%c0_78, %c0_79], %186 {strides = array<i32>} : memref<8x32xf32, #tpu.memory_space<vmem>>, vector<8x32xf32>,
    } else {
    }
    %c0 = arith.constant 0 : index
    %c0_1 = arith.constant 0 : index
    %3 = vector.load %arg16[%c0, %c0_1] : memref<8x32xf32, #tpu.memory_space<vmem>>, vector<8x32xf32>
    %4 = arith.truncf %3 : vector<8x32xf32> to vector<8x32xbf16>
    %c0_2 = arith.constant 0 : index
    %c0_3 = arith.constant 0 : index
    %c0_4 = arith.constant 0 : index
    %5 = vector.load %arg3[%c0_2, %c0_3, %c0_4] : memref<1x32x96xbf16, #tpu.memory_space<vmem>>, vector<1x32x96xbf16>
    %6 = vector.shape_cast %5 : vector<1x32x96xbf16> to vector<32x96xbf16>
    %cst = arith.constant dense<0.000000e+00> : vector<8x96xf32>
    %7 = tpu.matmul %4, %6, %cst {dimension_numbers = #tpu.dot_dimension_numbers<[1], [0], [0], [1], [0, 0, 1, 1], [], []>} : vector<8x32xbf16>, vector<32x96xbf16>, vector<8x96xf32> -> vector<8x96xf32>
    %c0_5 = arith.constant 0 : index
    %c0_6 = arith.constant 0 : index
    %c0_7 = arith.constant 0 : index
    %8 = vector.load %arg4[%c0_5, %c0_6, %c0_7] : memref<1x1x96xf32, #tpu.memory_space<vmem>>, vector<1x1x96xf32>
    %9 = vector.shape_cast %8 : vector<1x1x96xf32> to vector<1x96xf32>
    %10 = vector.broadcast %9 : vector<1x96xf32> to vector<8x96xf32>
    %11 = arith.addf %7, %10 : vector<8x96xf32>
    %12 = vector.extract_strided_slice %11 {offsets = [0, 0], sizes = [8, 8], strides = [1, 1]} : vector<8x96xf32> to vector<8x8xf32>
    %cst_8 = arith.constant 0.353553385 : f32
    %13 = vector.broadcast %cst_8 : f32 to vector<8x8xf32>
    %14 = arith.mulf %12, %13 : vector<8x8xf32>
    %15 = arith.truncf %14 : vector<8x8xf32> to vector<8x8xbf16>
    %16 = vector.extract_strided_slice %11 {offsets = [0, 32], sizes = [8, 8], strides = [1, 1]} : vector<8x96xf32> to vector<8x8xf32>
    %17 = arith.truncf %16 : vector<8x8xf32> to vector<8x8xbf16>
    %18 = vector.extract_strided_slice %11 {offsets = [0, 64], sizes = [8, 8], strides = [1, 1]} : vector<8x96xf32> to vector<8x8xf32>
    %19 = arith.truncf %18 : vector<8x8xf32> to vector<8x8xbf16>
    %cst_9 = arith.constant dense<0.000000e+00> : vector<8x8xf32>
    %20 = tpu.matmul %15, %17, %cst_9 {dimension_numbers = #tpu.dot_dimension_numbers<[1], [1], [0], [0], [0, 0, 1, 0], [], []>} : vector<8x8xbf16>, vector<8x8xbf16>, vector<8x8xf32> -> vector<8x8xf32>
    %cst_10 = arith.constant dense<0xFF800000> : vector<8xf32>
    %21 = vector.multi_reduction <maximumf>, %20, %cst_10 [1] : vector<8x8xf32> to vector<8xf32>
    %22 = vector.shape_cast %21 : vector<8xf32> to vector<8x1xf32>
    %23 = vector.broadcast %22 : vector<8x1xf32> to vector<8x8xf32>
    %24 = arith.subf %20, %23 : vector<8x8xf32>
    %25 = math.exp %24 : vector<8x8xf32>
    %cst_11 = arith.constant dense<0.000000e+00> : vector<8xf32>
    %26 = vector.multi_reduction <add>, %25, %cst_11 [1] : vector<8x8xf32> to vector<8xf32>
    %27 = vector.shape_cast %26 : vector<8xf32> to vector<8x1xf32>
    %28 = tpu.reciprocal %27 {approx = true} : vector<8x1xf32> -> vector<8x1xf32>
    %29 = vector.broadcast %28 : vector<8x1xf32> to vector<8x8xf32>
    %30 = arith.mulf %25, %29 : vector<8x8xf32>
    %31 = arith.truncf %30 : vector<8x8xf32> to vector<8x8xbf16>
    %cst_12 = arith.constant dense<0.000000e+00> : vector<8x8xf32>
    %32 = tpu.matmul %31, %19, %cst_12 {dimension_numbers = #tpu.dot_dimension_numbers<[1], [0], [0], [1], [0, 0, 1, 1], [], []>} : vector<8x8xbf16>, vector<8x8xbf16>, vector<8x8xf32> -> vector<8x8xf32>
    %33 = vector.extract_strided_slice %11 {offsets = [0, 8], sizes = [8, 8], strides = [1, 1]} : vector<8x96xf32> to vector<8x8xf32>
    %cst_13 = arith.constant 0.353553385 : f32
    %34 = vector.broadcast %cst_13 : f32 to vector<8x8xf32>
    %35 = arith.mulf %33, %34 : vector<8x8xf32>
    %36 = arith.truncf %35 : vector<8x8xf32> to vector<8x8xbf16>
    %37 = vector.extract_strided_slice %11 {offsets = [0, 40], sizes = [8, 8], strides = [1, 1]} : vector<8x96xf32> to vector<8x8xf32>
    %38 = arith.truncf %37 : vector<8x8xf32> to vector<8x8xbf16>
    %39 = vector.extract_strided_slice %11 {offsets = [0, 72], sizes = [8, 8], strides = [1, 1]} : vector<8x96xf32> to vector<8x8xf32>
    %40 = arith.truncf %39 : vector<8x8xf32> to vector<8x8xbf16>
    %cst_14 = arith.constant dense<0.000000e+00> : vector<8x8xf32>
    %41 = tpu.matmul %36, %38, %cst_14 {dimension_numbers = #tpu.dot_dimension_numbers<[1], [1], [0], [0], [0, 0, 1, 0], [], []>} : vector<8x8xbf16>, vector<8x8xbf16>, vector<8x8xf32> -> vector<8x8xf32>
    %cst_15 = arith.constant dense<0xFF800000> : vector<8xf32>
    %42 = vector.multi_reduction <maximumf>, %41, %cst_15 [1] : vector<8x8xf32> to vector<8xf32>
    %43 = vector.shape_cast %42 : vector<8xf32> to vector<8x1xf32>
    %44 = vector.broadcast %43 : vector<8x1xf32> to vector<8x8xf32>
    %45 = arith.subf %41, %44 : vector<8x8xf32>
    %46 = math.exp %45 : vector<8x8xf32>
    %cst_16 = arith.constant dense<0.000000e+00> : vector<8xf32>
    %47 = vector.multi_reduction <add>, %46, %cst_16 [1] : vector<8x8xf32> to vector<8xf32>
    %48 = vector.shape_cast %47 : vector<8xf32> to vector<8x1xf32>
    %49 = tpu.reciprocal %48 {approx = true} : vector<8x1xf32> -> vector<8x1xf32>
    %50 = vector.broadcast %49 : vector<8x1xf32> to vector<8x8xf32>
    %51 = arith.mulf %46, %50 : vector<8x8xf32>
    %52 = arith.truncf %51 : vector<8x8xf32> to vector<8x8xbf16>
    %cst_17 = arith.constant dense<0.000000e+00> : vector<8x8xf32>
    %53 = tpu.matmul %52, %40, %cst_17 {dimension_numbers = #tpu.dot_dimension_numbers<[1], [0], [0], [1], [0, 0, 1, 1], [], []>} : vector<8x8xbf16>, vector<8x8xbf16>, vector<8x8xf32> -> vector<8x8xf32>
    %54 = vector.extract_strided_slice %11 {offsets = [0, 16], sizes = [8, 8], strides = [1, 1]} : vector<8x96xf32> to vector<8x8xf32>
    %cst_18 = arith.constant 0.353553385 : f32
    %55 = vector.broadcast %cst_18 : f32 to vector<8x8xf32>
    %56 = arith.mulf %54, %55 : vector<8x8xf32>
    %57 = arith.truncf %56 : vector<8x8xf32> to vector<8x8xbf16>
    %58 = vector.extract_strided_slice %11 {offsets = [0, 48], sizes = [8, 8], strides = [1, 1]} : vector<8x96xf32> to vector<8x8xf32>
    %59 = arith.truncf %58 : vector<8x8xf32> to vector<8x8xbf16>
    %60 = vector.extract_strided_slice %11 {offsets = [0, 80], sizes = [8, 8], strides = [1, 1]} : vector<8x96xf32> to vector<8x8xf32>
    %61 = arith.truncf %60 : vector<8x8xf32> to vector<8x8xbf16>
    %cst_19 = arith.constant dense<0.000000e+00> : vector<8x8xf32>
    %62 = tpu.matmul %57, %59, %cst_19 {dimension_numbers = #tpu.dot_dimension_numbers<[1], [1], [0], [0], [0, 0, 1, 0], [], []>} : vector<8x8xbf16>, vector<8x8xbf16>, vector<8x8xf32> -> vector<8x8xf32>
    %cst_20 = arith.constant dense<0xFF800000> : vector<8xf32>
    %63 = vector.multi_reduction <maximumf>, %62, %cst_20 [1] : vector<8x8xf32> to vector<8xf32>
    %64 = vector.shape_cast %63 : vector<8xf32> to vector<8x1xf32>
    %65 = vector.broadcast %64 : vector<8x1xf32> to vector<8x8xf32>
    %66 = arith.subf %62, %65 : vector<8x8xf32>
    %67 = math.exp %66 : vector<8x8xf32>
    %cst_21 = arith.constant dense<0.000000e+00> : vector<8xf32>
    %68 = vector.multi_reduction <add>, %67, %cst_21 [1] : vector<8x8xf32> to vector<8xf32>
    %69 = vector.shape_cast %68 : vector<8xf32> to vector<8x1xf32>
    %70 = tpu.reciprocal %69 {approx = true} : vector<8x1xf32> -> vector<8x1xf32>
    %71 = vector.broadcast %70 : vector<8x1xf32> to vector<8x8xf32>
    %72 = arith.mulf %67, %71 : vector<8x8xf32>
    %73 = arith.truncf %72 : vector<8x8xf32> to vector<8x8xbf16>
    %cst_22 = arith.constant dense<0.000000e+00> : vector<8x8xf32>
    %74 = tpu.matmul %73, %61, %cst_22 {dimension_numbers = #tpu.dot_dimension_numbers<[1], [0], [0], [1], [0, 0, 1, 1], [], []>} : vector<8x8xbf16>, vector<8x8xbf16>, vector<8x8xf32> -> vector<8x8xf32>
    %75 = vector.extract_strided_slice %11 {offsets = [0, 24], sizes = [8, 8], strides = [1, 1]} : vector<8x96xf32> to vector<8x8xf32>
    %cst_23 = arith.constant 0.353553385 : f32
    %76 = vector.broadcast %cst_23 : f32 to vector<8x8xf32>
    %77 = arith.mulf %75, %76 : vector<8x8xf32>
    %78 = arith.truncf %77 : vector<8x8xf32> to vector<8x8xbf16>
    %79 = vector.extract_strided_slice %11 {offsets = [0, 56], sizes = [8, 8], strides = [1, 1]} : vector<8x96xf32> to vector<8x8xf32>
    %80 = arith.truncf %79 : vector<8x8xf32> to vector<8x8xbf16>
    %81 = vector.extract_strided_slice %11 {offsets = [0, 88], sizes = [8, 8], strides = [1, 1]} : vector<8x96xf32> to vector<8x8xf32>
    %82 = arith.truncf %81 : vector<8x8xf32> to vector<8x8xbf16>
    %cst_24 = arith.constant dense<0.000000e+00> : vector<8x8xf32>
    %83 = tpu.matmul %78, %80, %cst_24 {dimension_numbers = #tpu.dot_dimension_numbers<[1], [1], [0], [0], [0, 0, 1, 0], [], []>} : vector<8x8xbf16>, vector<8x8xbf16>, vector<8x8xf32> -> vector<8x8xf32>
    %cst_25 = arith.constant dense<0xFF800000> : vector<8xf32>
    %84 = vector.multi_reduction <maximumf>, %83, %cst_25 [1] : vector<8x8xf32> to vector<8xf32>
    %85 = vector.shape_cast %84 : vector<8xf32> to vector<8x1xf32>
    %86 = vector.broadcast %85 : vector<8x1xf32> to vector<8x8xf32>
    %87 = arith.subf %83, %86 : vector<8x8xf32>
    %88 = math.exp %87 : vector<8x8xf32>
    %cst_26 = arith.constant dense<0.000000e+00> : vector<8xf32>
    %89 = vector.multi_reduction <add>, %88, %cst_26 [1] : vector<8x8xf32> to vector<8xf32>
    %90 = vector.shape_cast %89 : vector<8xf32> to vector<8x1xf32>
    %91 = tpu.reciprocal %90 {approx = true} : vector<8x1xf32> -> vector<8x1xf32>
    %92 = vector.broadcast %91 : vector<8x1xf32> to vector<8x8xf32>
    %93 = arith.mulf %88, %92 : vector<8x8xf32>
    %94 = arith.truncf %93 : vector<8x8xf32> to vector<8x8xbf16>
    %cst_27 = arith.constant dense<0.000000e+00> : vector<8x8xf32>
    %95 = tpu.matmul %94, %82, %cst_27 {dimension_numbers = #tpu.dot_dimension_numbers<[1], [0], [0], [1], [0, 0, 1, 1], [], []>} : vector<8x8xbf16>, vector<8x8xbf16>, vector<8x8xf32> -> vector<8x8xf32>
    %96 = tpu.concatenate %32, %53, %74, %95 in 1 : vector<8x8xf32>, vector<8x8xf32>, vector<8x8xf32>, vector<8x8xf32> -> vector<8x32xf32>
    %97 = arith.truncf %96 : vector<8x32xf32> to vector<8x32xbf16>
    %c0_28 = arith.constant 0 : index
    %c0_29 = arith.constant 0 : index
    %c0_30 = arith.constant 0 : index
    %98 = vector.load %arg5[%c0_28, %c0_29, %c0_30] : memref<1x32x32xbf16, #tpu.memory_space<vmem>>, vector<1x32x32xbf16>
    %99 = vector.shape_cast %98 : vector<1x32x32xbf16> to vector<32x32xbf16>
    %cst_31 = arith.constant dense<0.000000e+00> : vector<8x32xf32>
    %100 = tpu.matmul %97, %99, %cst_31 {dimension_numbers = #tpu.dot_dimension_numbers<[1], [0], [0], [1], [0, 0, 1, 1], [], []>} : vector<8x32xbf16>, vector<32x32xbf16>, vector<8x32xf32> -> vector<8x32xf32>
    %c0_32 = arith.constant 0 : index
    %c0_33 = arith.constant 0 : index
    %c0_34 = arith.constant 0 : index
    %101 = vector.load %arg6[%c0_32, %c0_33, %c0_34] : memref<1x1x32xf32, #tpu.memory_space<vmem>>, vector<1x1x32xf32>
    %102 = vector.shape_cast %101 : vector<1x1x32xf32> to vector<1x32xf32>
    %103 = vector.broadcast %102 : vector<1x32xf32> to vector<8x32xf32>
    %104 = arith.addf %100, %103 : vector<8x32xf32>
    %105 = arith.addf %3, %104 : vector<8x32xf32>
    %cst_35 = arith.constant dense<0.000000e+00> : vector<8xf32>
    %106 = vector.multi_reduction <add>, %105, %cst_35 [1] : vector<8x32xf32> to vector<8xf32>
    %107 = vector.shape_cast %106 : vector<8xf32> to vector<8x1xf32>
    %cst_36 = arith.constant 3.200000e+01 : f32
    %108 = vector.broadcast %cst_36 : f32 to vector<8x1xf32>
    %109 = arith.divf %107, %108 : vector<8x1xf32>
    %110 = vector.broadcast %109 : vector<8x1xf32> to vector<8x32xf32>
    %111 = arith.subf %105, %110 : vector<8x32xf32>
    %112 = vector.broadcast %109 : vector<8x1xf32> to vector<8x32xf32>
    %113 = arith.subf %105, %112 : vector<8x32xf32>
    %114 = arith.mulf %111, %113 : vector<8x32xf32>
    %cst_37 = arith.constant dense<0.000000e+00> : vector<8xf32>
    %115 = vector.multi_reduction <add>, %114, %cst_37 [1] : vector<8x32xf32> to vector<8xf32>
    %116 = vector.shape_cast %115 : vector<8xf32> to vector<8x1xf32>
    %cst_38 = arith.constant 3.200000e+01 : f32
    %117 = vector.broadcast %cst_38 : f32 to vector<8x1xf32>
    %118 = arith.divf %116, %117 : vector<8x1xf32>
    %119 = vector.broadcast %109 : vector<8x1xf32> to vector<8x32xf32>
    %120 = arith.subf %105, %119 : vector<8x32xf32>
    %cst_39 = arith.constant 9.99999974E-6 : f32
    %121 = vector.broadcast %cst_39 : f32 to vector<8x1xf32>
    %122 = arith.addf %118, %121 : vector<8x1xf32>
    %123 = math.rsqrt %122 : vector<8x1xf32>
    %124 = vector.broadcast %123 : vector<8x1xf32> to vector<8x32xf32>
    %125 = arith.mulf %120, %124 : vector<8x32xf32>
    %c0_40 = arith.constant 0 : index
    %c0_41 = arith.constant 0 : index
    %c0_42 = arith.constant 0 : index
    %126 = vector.load %arg7[%c0_40, %c0_41, %c0_42] : memref<1x1x32xf32, #tpu.memory_space<vmem>>, vector<1x1x32xf32>
    %127 = vector.shape_cast %126 : vector<1x1x32xf32> to vector<1x32xf32>
    %128 = vector.broadcast %127 : vector<1x32xf32> to vector<8x32xf32>
    %129 = arith.mulf %125, %128 : vector<8x32xf32>
    %c0_43 = arith.constant 0 : index
    %c0_44 = arith.constant 0 : index
    %c0_45 = arith.constant 0 : index
    %130 = vector.load %arg8[%c0_43, %c0_44, %c0_45] : memref<1x1x32xf32, #tpu.memory_space<vmem>>, vector<1x1x32xf32>
    %131 = vector.shape_cast %130 : vector<1x1x32xf32> to vector<1x32xf32>
    %132 = vector.broadcast %131 : vector<1x32xf32> to vector<8x32xf32>
    %133 = arith.addf %129, %132 : vector<8x32xf32>
    %134 = arith.truncf %133 : vector<8x32xf32> to vector<8x32xbf16>
    %c0_46 = arith.constant 0 : index
    %c0_47 = arith.constant 0 : index
    %c0_48 = arith.constant 0 : index
    %135 = vector.load %arg9[%c0_46, %c0_47, %c0_48] : memref<1x32x128xbf16, #tpu.memory_space<vmem>>, vector<1x32x128xbf16>
    %136 = vector.shape_cast %135 : vector<1x32x128xbf16> to vector<32x128xbf16>
    %cst_49 = arith.constant dense<0.000000e+00> : vector<8x128xf32>
    %137 = tpu.matmul %134, %136, %cst_49 {dimension_numbers = #tpu.dot_dimension_numbers<[1], [0], [0], [1], [0, 0, 1, 1], [], []>} : vector<8x32xbf16>, vector<32x128xbf16>, vector<8x128xf32> -> vector<8x128xf32>
    %c0_50 = arith.constant 0 : index
    %c0_51 = arith.constant 0 : index
    %c0_52 = arith.constant 0 : index
    %138 = vector.load %arg10[%c0_50, %c0_51, %c0_52] : memref<1x1x128xf32, #tpu.memory_space<vmem>>, vector<1x1x128xf32>
    %139 = vector.shape_cast %138 : vector<1x1x128xf32> to vector<1x128xf32>
    %140 = vector.broadcast %139 : vector<1x128xf32> to vector<8x128xf32>
    %141 = arith.addf %137, %140 : vector<8x128xf32>
    %cst_53 = arith.constant 0.000000e+00 : f32
    %142 = vector.broadcast %cst_53 : f32 to vector<8x128xf32>
    %143 = arith.maximumf %141, %142 : vector<8x128xf32>
    %144 = arith.truncf %143 : vector<8x128xf32> to vector<8x128xbf16>
    %c0_54 = arith.constant 0 : index
    %c0_55 = arith.constant 0 : index
    %c0_56 = arith.constant 0 : index
    %145 = vector.load %arg11[%c0_54, %c0_55, %c0_56] : memref<1x128x32xbf16, #tpu.memory_space<vmem>>, vector<1x128x32xbf16>
    %146 = vector.shape_cast %145 : vector<1x128x32xbf16> to vector<128x32xbf16>
    %cst_57 = arith.constant dense<0.000000e+00> : vector<8x32xf32>
    %147 = tpu.matmul %144, %146, %cst_57 {dimension_numbers = #tpu.dot_dimension_numbers<[1], [0], [0], [1], [0, 0, 1, 1], [], []>} : vector<8x128xbf16>, vector<128x32xbf16>, vector<8x32xf32> -> vector<8x32xf32>
    %c0_58 = arith.constant 0 : index
    %c0_59 = arith.constant 0 : index
    %c0_60 = arith.constant 0 : index
    %148 = vector.load %arg12[%c0_58, %c0_59, %c0_60] : memref<1x1x32xf32, #tpu.memory_space<vmem>>, vector<1x1x32xf32>
    %149 = vector.shape_cast %148 : vector<1x1x32xf32> to vector<1x32xf32>
    %150 = vector.broadcast %149 : vector<1x32xf32> to vector<8x32xf32>
    %151 = arith.addf %147, %150 : vector<8x32xf32>
    %152 = arith.addf %133, %151 : vector<8x32xf32>
    %cst_61 = arith.constant dense<0.000000e+00> : vector<8xf32>
    %153 = vector.multi_reduction <add>, %152, %cst_61 [1] : vector<8x32xf32> to vector<8xf32>
    %154 = vector.shape_cast %153 : vector<8xf32> to vector<8x1xf32>
    %cst_62 = arith.constant 3.200000e+01 : f32
    %155 = vector.broadcast %cst_62 : f32 to vector<8x1xf32>
    %156 = arith.divf %154, %155 : vector<8x1xf32>
    %157 = vector.broadcast %156 : vector<8x1xf32> to vector<8x32xf32>
    %158 = arith.subf %152, %157 : vector<8x32xf32>
    %159 = vector.broadcast %156 : vector<8x1xf32> to vector<8x32xf32>
    %160 = arith.subf %152, %159 : vector<8x32xf32>
    %161 = arith.mulf %158, %160 : vector<8x32xf32>
    %cst_63 = arith.constant dense<0.000000e+00> : vector<8xf32>
    %162 = vector.multi_reduction <add>, %161, %cst_63 [1] : vector<8x32xf32> to vector<8xf32>
    %163 = vector.shape_cast %162 : vector<8xf32> to vector<8x1xf32>
    %cst_64 = arith.constant 3.200000e+01 : f32
    %164 = vector.broadcast %cst_64 : f32 to vector<8x1xf32>
    %165 = arith.divf %163, %164 : vector<8x1xf32>
    %166 = vector.broadcast %156 : vector<8x1xf32> to vector<8x32xf32>
    %167 = arith.subf %152, %166 : vector<8x32xf32>
    %cst_65 = arith.constant 9.99999974E-6 : f32
    %168 = vector.broadcast %cst_65 : f32 to vector<8x1xf32>
    %169 = arith.addf %165, %168 : vector<8x1xf32>
    %170 = math.rsqrt %169 : vector<8x1xf32>
    %171 = vector.broadcast %170 : vector<8x1xf32> to vector<8x32xf32>
    %172 = arith.mulf %167, %171 : vector<8x32xf32>
    %c0_66 = arith.constant 0 : index
    %c0_67 = arith.constant 0 : index
    %c0_68 = arith.constant 0 : index
    %173 = vector.load %arg13[%c0_66, %c0_67, %c0_68] : memref<1x1x32xf32, #tpu.memory_space<vmem>>, vector<1x1x32xf32>
    %174 = vector.shape_cast %173 : vector<1x1x32xf32> to vector<1x32xf32>
    %175 = vector.broadcast %174 : vector<1x32xf32> to vector<8x32xf32>
    %176 = arith.mulf %172, %175 : vector<8x32xf32>
    %c0_69 = arith.constant 0 : index
    %c0_70 = arith.constant 0 : index
    %c0_71 = arith.constant 0 : index
    %177 = vector.load %arg14[%c0_69, %c0_70, %c0_71] : memref<1x1x32xf32, #tpu.memory_space<vmem>>, vector<1x1x32xf32>
    %178 = vector.shape_cast %177 : vector<1x1x32xf32> to vector<1x32xf32>
    %179 = vector.broadcast %178 : vector<1x32xf32> to vector<8x32xf32>
    %180 = arith.addf %176, %179 : vector<8x32xf32>
    %c0_72 = arith.constant 0 : index
    %c0_73 = arith.constant 0 : index
    %181 = vector.load %arg16[%c0_72, %c0_73] : memref<8x32xf32, #tpu.memory_space<vmem>>, vector<8x32xf32>
    tpu.vector_store %arg16[%c0_72, %c0_73], %180 {strides = array<i32>} : memref<8x32xf32, #tpu.memory_space<vmem>>, vector<8x32xf32>,
    %c1_i32 = arith.constant 1 : i32
    %182 = arith.cmpi eq, %arg1, %c1_i32 : i32
    %183 = arith.extui %182 : i1 to i32
    %c0_i32_74 = arith.constant 0 : i32
    %184 = arith.cmpi ne, %183, %c0_i32_74 : i32
    scf.if %184 {
      %c0_75 = arith.constant 0 : index
      %c0_76 = arith.constant 0 : index
      %c0_77 = arith.constant 0 : index
      %185 = vector.load %arg15[%c0_75, %c0_76, %c0_77] : memref<1x8x32xf32, #tpu.memory_space<vmem>>, vector<1x8x32xf32>
      %186 = vector.shape_cast %185 : vector<1x8x32xf32> to vector<8x32xf32>
      %187 = vector.shape_cast %180 : vector<8x32xf32> to vector<1x8x32xf32>
      tpu.vector_store %arg15[%c0_75, %c0_76, %c0_77], %187 {strides = array<i32>} : memref<1x8x32xf32, #tpu.memory_space<vmem>>, vector<1x8x32xf32>,
    } else {
    }
    return
  }
  func.func @transform_0(%arg0: i32, %arg1: i32) -> (i32, i32, i32) {
    %c0_i32 = arith.constant 0 : i32
    %c0_i32_0 = arith.constant 0 : i32
    %c0_i32_1 = arith.constant 0 : i32
    return %arg0, %c0_i32, %c0_i32_0 : i32, i32, i32
  }
  func.func @transform_1(%arg0: i32, %arg1: i32) -> (i32, i32, i32) {
    %c0_i32 = arith.constant 0 : i32
    %c0_i32_0 = arith.constant 0 : i32
    %c0_i32_1 = arith.constant 0 : i32
    return %arg1, %c0_i32, %c0_i32_0 : i32, i32, i32
  }
  func.func @transform_2(%arg0: i32, %arg1: i32) -> (i32, i32, i32) {
    %c0_i32 = arith.constant 0 : i32
    %c0_i32_0 = arith.constant 0 : i32
    %c0_i32_1 = arith.constant 0 : i32
    return %arg1, %c0_i32, %c0_i32_0 : i32, i32, i32
  }
  func.func @transform_3(%arg0: i32, %arg1: i32) -> (i32, i32, i32) {
    %c0_i32 = arith.constant 0 : i32
    %c0_i32_0 = arith.constant 0 : i32
    %c0_i32_1 = arith.constant 0 : i32
    return %arg1, %c0_i32, %c0_i32_0 : i32, i32, i32
  }
  func.func @transform_4(%arg0: i32, %arg1: i32) -> (i32, i32, i32) {
    %c0_i32 = arith.constant 0 : i32
    %c0_i32_0 = arith.constant 0 : i32
    %c0_i32_1 = arith.constant 0 : i32
    return %arg1, %c0_i32, %c0_i32_0 : i32, i32, i32
  }
  func.func @transform_5(%arg0: i32, %arg1: i32) -> (i32, i32, i32) {
    %c0_i32 = arith.constant 0 : i32
    %c0_i32_0 = arith.constant 0 : i32
    %c0_i32_1 = arith.constant 0 : i32
    return %arg1, %c0_i32, %c0_i32_0 : i32, i32, i32
  }
  func.func @transform_6(%arg0: i32, %arg1: i32) -> (i32, i32, i32) {
    %c0_i32 = arith.constant 0 : i32
    %c0_i32_0 = arith.constant 0 : i32
    %c0_i32_1 = arith.constant 0 : i32
    return %arg1, %c0_i32, %c0_i32_0 : i32, i32, i32
  }
  func.func @transform_7(%arg0: i32, %arg1: i32) -> (i32, i32, i32) {
    %c0_i32 = arith.constant 0 : i32
    %c0_i32_0 = arith.constant 0 : i32
    %c0_i32_1 = arith.constant 0 : i32
    return %arg1, %c0_i32, %c0_i32_0 : i32, i32, i32
  }
  func.func @transform_8(%arg0: i32, %arg1: i32) -> (i32, i32, i32) {
    %c0_i32 = arith.constant 0 : i32
    %c0_i32_0 = arith.constant 0 : i32
    %c0_i32_1 = arith.constant 0 : i32
    return %arg1, %c0_i32, %c0_i32_0 : i32, i32, i32
  }
  func.func @transform_9(%arg0: i32, %arg1: i32) -> (i32, i32, i32) {
    %c0_i32 = arith.constant 0 : i32
    %c0_i32_0 = arith.constant 0 : i32
    %c0_i32_1 = arith.constant 0 : i32
    return %arg1, %c0_i32, %c0_i32_0 : i32, i32, i32
  }
  func.func @transform_10(%arg0: i32, %arg1: i32) -> (i32, i32, i32) {
    %c0_i32 = arith.constant 0 : i32
    %c0_i32_0 = arith.constant 0 : i32
    %c0_i32_1 = arith.constant 0 : i32
    return %arg1, %c0_i32, %c0_i32_0 : i32, i32, i32
  }
  func.func @transform_11(%arg0: i32, %arg1: i32) -> (i32, i32, i32) {
    %c0_i32 = arith.constant 0 : i32
    %c0_i32_0 = arith.constant 0 : i32
    %c0_i32_1 = arith.constant 0 : i32
    return %arg1, %c0_i32, %c0_i32_0 : i32, i32, i32
  }
  func.func @transform_12(%arg0: i32, %arg1: i32) -> (i32, i32, i32) {
    %c0_i32 = arith.constant 0 : i32
    %c0_i32_0 = arith.constant 0 : i32
    %c0_i32_1 = arith.constant 0 : i32
    return %arg1, %c0_i32, %c0_i32_0 : i32, i32, i32
  }
  func.func @transform_13(%arg0: i32, %arg1: i32) -> (i32, i32, i32) {
    %c0_i32 = arith.constant 0 : i32
    %c0_i32_0 = arith.constant 0 : i32
    %c0_i32_1 = arith.constant 0 : i32
    return %arg0, %c0_i32, %c0_i32_0 : i32, i32, i32
  }
}

</mosaic_0001>

<llo_original>
// kernel: transformer_forward.3
$region0: #{transformer_forward.3}
  #allocation0 [shape = 'u32[]', space=smem, size = 0x4, offset = 0x4, fixed_abs, tag = 'smem constant byte address 0x4 - core index']
  #allocation1 [shape = 'u32[144,128]{1,0:T(1,128)}', space=vmem, size = 0x12000, scoped, tag = 'internal scratch']
  %s0 = inlined_call_operand.vmem [shape: f32[2,8,4], index: 0, kind: input, shape index: {}]
  %s1 = inlined_call_operand.vmem [shape: bf16[4,32], index: 1, kind: input, shape index: {}]
  %s2 = inlined_call_operand.vmem [shape: f32[1,32], index: 2, kind: input, shape index: {}]
  %s3 = inlined_call_operand.vmem [shape: f32[8,32], index: 3, kind: input, shape index: {}]
  %s4 = inlined_call_operand.vmem [shape: f32[2,8,32], index: 4, kind: output, shape index: {}]
  %s5 = sld [smem:[#allocation0]]
  $region49: #{transformer_forward.3} parent=0
    _
  %s7 = ssub.s32 1, %s5
  %s8 = scalar_select 0, %s7, %s5
  loop: start=0, step=1, limit=4
  $region2: #{transformer_forward.3} parent=0 // loop_pre_header
    _
  $region3: #{transformer_forward.3} parent=0 // loop_header
    %s10 = sphi 0, %s14
    %p11 = scmp.ge.s32.totalorder %s10, 4
    %s20 = sphi 0, %s22
    %s23 = sphi 0, %s20
    %s24 = sphi 0, %s23
    %s40 = sphi 0, %s24
    %s44 = sphi 0, %s44
    %s46 = sphi 0, %s44
    %s47 = sphi 0, %s46
    %s61 = sphi 0, %s47
    %s65 = sphi 0, %s65
    %s67 = sphi 0, %s65
    %s68 = sphi 0, %s67
    %s82 = sphi 0, %s68
    %s86 = sphi 0, %s86
    %s88 = sphi 0, %s86
    %s89 = sphi 0, %s88
    %s103 = sphi 0, %s89
    %s109 = sphi 0, %s111
    %s112 = sphi 0, %s109
    %s113 = sphi 0, %s112
    %s129 = sphi 0, %s113
  $region4: #{transformer_forward.3} parent=0 // loop_header_branch
    %13 = sbr.rel (%p11) target = $region8
  $region5: #{transformer_forward.3} parent=0 // loop_body
    %s15 = ssub.s32 %s10, 1
    %s16 = ssub.s32 %s10, 2
    %s17 = sadd.s32 %s10, 1
    %s18 = ssub.s32 %s10, %s17
    %p19 = scmp.eq.s32.totalorder %s18, 0
    %s21 = sadd.s32 %s20, 1
    %s22 = scalar_select %p19, %s20, %s21
    %p25 = pneg %p19
    %p26 = scmp.eq.s32.totalorder %s10, 1
    %p27 = por %p25, %p26
    %p28 = scmp.ne.s32.totalorder %s20, %s23
    %p29 = scmp.eq.s32.totalorder %s10, 0
    %p30 = por %p28, %p29
    %p31 = scmp.ne.s32.totalorder %s20, %s23
    %p32 = scmp.eq.s32.totalorder %s15, 1
    %p33 = por %p31, %p32
    %p34 = scmp.ne.s32.totalorder %s23, %s24
    %p35 = scmp.eq.s32.totalorder %s15, 0
    %p36 = por %p34, %p35
    %p37 = scmp.ne.s32.totalorder %s23, %s24
    %p38 = scmp.eq.s32.totalorder %s16, 1
    %p39 = por %p37, %p38
    %p41 = scmp.ne.s32.totalorder %s24, %s40
    %p42 = scmp.eq.s32.totalorder %s16, 0
    %p43 = por %p41, %p42
    %s45 = sadd.s32 %s44, 1
    %p48 = scmp.eq.s32.totalorder %s10, 1
    %p49 = scmp.ne.s32.totalorder %s44, %s46
    %p50 = scmp.eq.s32.totalorder %s10, 0
    %p51 = por %p49, %p50
    %p52 = scmp.ne.s32.totalorder %s44, %s46
    %p53 = scmp.eq.s32.totalorder %s15, 1
    %p54 = por %p52, %p53
    %p55 = scmp.ne.s32.totalorder %s46, %s47
    %p56 = scmp.eq.s32.totalorder %s15, 0
    %p57 = por %p55, %p56
    %p58 = scmp.ne.s32.totalorder %s46, %s47
    %p59 = scmp.eq.s32.totalorder %s16, 1
    %p60 = por %p58, %p59
    %p62 = scmp.ne.s32.totalorder %s47, %s61
    %p63 = scmp.eq.s32.totalorder %s16, 0
    %p64 = por %p62, %p63
    %s66 = sadd.s32 %s65, 1
    %p69 = scmp.eq.s32.totalorder %s10, 1
    %p70 = scmp.ne.s32.totalorder %s65, %s67
    %p71 = scmp.eq.s32.totalorder %s10, 0
    %p72 = por %p70, %p71
    %p73 = scmp.ne.s32.totalorder %s65, %s67
    %p74 = scmp.eq.s32.totalorder %s15, 1
    %p75 = por %p73, %p74
    %p76 = scmp.ne.s32.totalorder %s67, %s68
    %p77 = scmp.eq.s32.totalorder %s15, 0
    %p78 = por %p76, %p77
    %p79 = scmp.ne.s32.totalorder %s67, %s68
    %p80 = scmp.eq.s32.totalorder %s16, 1
    %p81 = por %p79, %p80
    %p83 = scmp.ne.s32.totalorder %s68, %s82
    %p84 = scmp.eq.s32.totalorder %s16, 0
    %p85 = por %p83, %p84
    %s87 = sadd.s32 %s86, 1
    %p90 = scmp.eq.s32.totalorder %s10, 1
    %p91 = scmp.ne.s32.totalorder %s86, %s88
    %p92 = scmp.eq.s32.totalorder %s10, 0
    %p93 = por %p91, %p92
    %p94 = scmp.ne.s32.totalorder %s86, %s88
    %p95 = scmp.eq.s32.totalorder %s15, 1
    %p96 = por %p94, %p95
    %p97 = scmp.ne.s32.totalorder %s88, %s89
    %p98 = scmp.eq.s32.totalorder %s15, 0
    %p99 = por %p97, %p98
    %p100 = scmp.ne.s32.totalorder %s88, %s89
    %p101 = scmp.eq.s32.totalorder %s16, 1
    %p102 = por %p100, %p101
    %p104 = scmp.ne.s32.totalorder %s89, %s103
    %p105 = scmp.eq.s32.totalorder %s16, 0
    %p106 = por %p104, %p105
    %s107 = ssub.s32 %s10, %s17
    %p108 = scmp.eq.s32.totalorder %s107, 0
    %s110 = sadd.s32 %s109, 1
    %s111 = scalar_select %p108, %s109, %s110
    %p114 = pneg %p108
    %p115 = scmp.eq.s32.totalorder %s10, 1
    %p116 = por %p114, %p115
    %p117 = scmp.ne.s32.totalorder %s109, %s112
    %p118 = scmp.eq.s32.totalorder %s10, 0
    %p119 = por %p117, %p118
    %p120 = scmp.ne.s32.totalorder %s109, %s112
    %p121 = scmp.eq.s32.totalorder %s15, 1
    %p122 = por %p120, %p121
    %p123 = scmp.ne.s32.totalorder %s112, %s113
    %p124 = scmp.eq.s32.totalorder %s15, 0
    %p125 = por %p123, %p124
    %p126 = scmp.ne.s32.totalorder %s112, %s113
    %p127 = scmp.eq.s32.totalorder %s16, 1
    %p128 = por %p126, %p127
    %p130 = scmp.ne.s32.totalorder %s113, %s129
    %p131 = scmp.eq.s32.totalorder %s16, 0
    %p132 = por %p130, %p131
    %p133 = scmp.le.s32.totalorder 1, %s10
    %p134 = scmp.lt.s32.totalorder %s10, 3
    %p135 = pnand %p133, %p134
    %p136 = pneg %p135
    // Predicated region
    $region9: #{transformer_forward.3} parent=5 // pred_check
      _
    $region10: #{transformer_forward.3} parent=5 // pred_check_branch
      %138 = sbr.rel (%p135) target = $region12
    $region11: #{transformer_forward.3} parent=5 // pred_region
      %s139 = ssub.s32 %s10, 1
      // Predicated region
      $region13: #{transformer_forward.3} parent=11 // pred_check
        %p140 = pneg %p57
      $region14: #{transformer_forward.3} parent=11 // pred_check_branch
        %142 = sbr.rel (%p140) target = $region16
      $region15: #{transformer_forward.3} parent=11 // pred_region
        _
      $region16: #{transformer_forward.3} parent=11 // pred_fallthru
        _
      // Predicated region
      $region17: #{transformer_forward.3} parent=11 // pred_check
        %p143 = pneg %p78
      $region18: #{transformer_forward.3} parent=11 // pred_check_branch
        %145 = sbr.rel (%p143) target = $region20
      $region19: #{transformer_forward.3} parent=11 // pred_region
        _
      $region20: #{transformer_forward.3} parent=11 // pred_fallthru
        _
      // Predicated region
      $region21: #{transformer_forward.3} parent=11 // pred_check
        %p146 = pneg %p99
      $region22: #{transformer_forward.3} parent=11 // pred_check_branch
        %148 = sbr.rel (%p146) target = $region24
      $region23: #{transformer_forward.3} parent=11 // pred_region
        _
      $region24: #{transformer_forward.3} parent=11 // pred_fallthru
        _
    $region12: #{transformer_forward.3} parent=5 // pred_fallthru
      _
    %p149 = scmp.lt.s32.totalorder %s10, 2
    // Predicated region
    $region25: #{transformer_forward.3} parent=5 // pred_check
      %p150 = pneg %p149
    $region26: #{transformer_forward.3} parent=5 // pred_check_branch
      %152 = sbr.rel (%p150) target = $region28
    $region27: #{transformer_forward.3} parent=5 // pred_region
      // Predicated region
      $region29: #{transformer_forward.3} parent=27 // pred_check
        %p153 = pneg %p30
      $region30: #{transformer_forward.3} parent=27 // pred_check_branch
        %155 = sbr.rel (%p153) target = $region32
      $region31: #{transformer_forward.3} parent=27 // pred_region
        %p156 = scmp.lt.s32.totalorder %s10, 1
        %s157 = scalar_select %p156, %s10, 1
        %s158 = smul.addr %s157, 8
        %s159 = scalar_lea.vmem %s0, %s158
      $region32: #{transformer_forward.3} parent=27 // pred_fallthru
        _
    $region28: #{transformer_forward.3} parent=5 // pred_fallthru
      _
    %p160 = scmp.le.s32.totalorder 1, %s10
    %p161 = scmp.lt.s32.totalorder %s10, 3
    %p162 = pnand %p160, %p161
    %p163 = pneg %p162
    // Predicated region
    $region33: #{transformer_forward.3} parent=5 // pred_check
      _
    $region34: #{transformer_forward.3} parent=5 // pred_check_branch
      %165 = sbr.rel (%p162) target = $region36
    $region35: #{transformer_forward.3} parent=5 // pred_region
      %s166 = ssub.s32 %s10, 1
      %p167 = scmp.lt.s32.totalorder %s15, 1
      %s168 = scalar_select %p167, %s15, 1
      %s169 = smul.addr %s168, 8
      %s170 = scalar_lea.vmem %s0, %s169
      %p171 = pneg %p36
      %p172 = pneg %p33
      %p173 = pneg %p57
      %p174 = pneg %p54
      %p175 = pneg %p78
      %p176 = pneg %p75
      %p177 = pneg %p99
      %p178 = pneg %p96
      %p179 = pneg %p125
      %p180 = pneg %p122
      %p181 = scmp.lt.s32.totalorder %s15, 1
      %s182 = scalar_select %p181, %s15, 1
      %s183 = smul.addr %s182, 8
      %s184 = scalar_lea.vmem %s4, %s183
      %p185 = scmp.lt.s32.totalorder %s15, 1
      %s186 = scalar_select %p185, %s15, 1
      %s187 = smul.addr %s186, 8
      %s188 = scalar_lea.vmem %s0, %s187
      %p189 = scmp.lt.s32.totalorder %s15, 1
      %s190 = scalar_select %p189, %s15, 1
      %s191 = smul.addr %s190, 8
      %s192 = scalar_lea.vmem %s4, %s191
      %v194 = vld [vmem:[%s188] sm:$0xff]
      %v195 = vpack.c.bf16 %v194, %v194
      %v196 = vld [vmem:[%s1] sm:$0x3]
      %v197 = vld [vmem:[%s2] sm:$0x1]
      %v199 = vlaneseq
      %v200 = vshrl.u32 %v199, 7
      %v201 = vsub.s32 0, %v200
      %v202 = vrot.slane %v197, %v201
      %vm204 = vcmask 31744
      %v206 = vsel %vm204, %v195, 0
      %vm208 = vcmask 1041408
      %v210 = vsel %vm208, %v196, 0
      %212 = vmatprep.subr.bf16.mxu0 0
      %213 = vmatpush1.bf16.msra.mxu0 0
      %214 = vmatprep.subr.bf16.mxu0 0
      %215 = vmatpush1.bf16.msra.mxu0 0
      %216 = vmatprep.subr.bf16.mxu0 0
      %217 = vmatpush1.bf16.msra.mxu0 0
      %218 = vmatprep.subr.bf16.mxu0 0
      %219 = vmatpush1.bf16.msra.mxu0 0
      %220 = vmatprep.subr.bf16.mxu0 0
      %221 = vmatpush1.bf16.msra.mxu0 0
      %222 = vmatprep.subr.bf16.mxu0 0
      %223 = vmatpush1.bf16.msra.mxu0 0
      %224 = vmatprep.subr.bf16.mxu0 0
      %225 = vmatpush1.bf16.msra.mxu0 0
      %226 = vmatprep.subr.bf16.mxu0 0
      %227 = vmatpush1.bf16.msra.mxu0 %v210
      %228 = vmatprep.subr.bf16.mxu0 0
      %229 = vmatpush2.bf16.msra.mxu0 0
      %230 = vmatprep.subr.bf16.mxu0 0
      %231 = vmatpush2.bf16.msra.mxu0 0
      %232 = vmatprep.subr.bf16.mxu0 0
      %233 = vmatpush2.bf16.msra.mxu0 0
      %234 = vmatprep.subr.bf16.mxu0 0
      %235 = vmatpush2.bf16.msra.mxu0 0
      %236 = vmatprep.subr.bf16.mxu0 0
      %237 = vmatpush2.bf16.msra.mxu0 0
      %238 = vmatprep.subr.bf16.mxu0 0
      %239 = vmatpush2.bf16.msra.mxu0 0
      %240 = vmatprep.subr.bf16.mxu0 0
      %241 = vmatpush2.bf16.msra.mxu0 0
      %242 = vmatprep.subr.bf16.mxu0 0
      %243 = vmatpush2.bf16.msra.mxu0 0
      %244 = vmatprep.mubr.bf16.mxu0 0
      %245 = vmatmul.mubr.bf16.gmra.mxu0 %v206
      %v246 = vpop.f32.mrf.mxu0
      %v247 = vadd.f32 %v202, %v246
      %v248 = vpop.f32.mrf.mxu0
      %v249 = vpop.f32.mrf.mxu0
      %v250 = vpop.f32.mrf.mxu0
      %251 = vdwg.mxu0
      %v252 = vld [vmem:[%s3] sm:$0xff]
      %v253 = vadd.f32 %v247, %v252
      %vm254 = vcmask 261120
      %255 = vst.msk [vmem:[%s192] sm:$0xff] %vm254, %v253
      %p256 = scmp.lt.s32.totalorder %s15, 1
      %s257 = scalar_select %p256, %s15, 1
      %s258 = smul.addr %s257, 8
      %s259 = scalar_lea.vmem %s4, %s258
      // Predicated region
      $region37: #{transformer_forward.3} parent=35 // pred_check
        %p260 = pneg %p122
      $region38: #{transformer_forward.3} parent=35 // pred_check_branch
        %262 = sbr.rel (%p260) target = $region40
      $region39: #{transformer_forward.3} parent=35 // pred_region
        _
      $region40: #{transformer_forward.3} parent=35 // pred_fallthru
        _
    $region36: #{transformer_forward.3} parent=5 // pred_fallthru
      _
    %p263 = scmp.le.s32.totalorder 2, %s10
    // Predicated region
    $region41: #{transformer_forward.3} parent=5 // pred_check
      %p264 = pneg %p263
    $region42: #{transformer_forward.3} parent=5 // pred_check_branch
      %266 = sbr.rel (%p264) target = $region44
    $region43: #{transformer_forward.3} parent=5 // pred_region
      %s267 = ssub.s32 %s10, 2
      // Predicated region
      $region45: #{transformer_forward.3} parent=43 // pred_check
        %p268 = pneg %p128
      $region46: #{transformer_forward.3} parent=43 // pred_check_branch
        %270 = sbr.rel (%p268) target = $region48
      $region47: #{transformer_forward.3} parent=43 // pred_region
        %p271 = scmp.lt.s32.totalorder %s16, 1
        %s272 = scalar_select %p271, %s16, 1
        %s273 = smul.addr %s272, 8
        %s274 = scalar_lea.vmem %s4, %s273
      $region48: #{transformer_forward.3} parent=43 // pred_fallthru
        _
    $region44: #{transformer_forward.3} parent=5 // pred_fallthru
      _
  $region6: #{transformer_forward.3} parent=0 // loop_footer
    %s14 = sadd.s32 1, %s10
  $region7: #{transformer_forward.3} parent=0 // loop_footer_branch
    %9 = sbr.rel target = $region3
  $region8: #{transformer_forward.3} parent=0 // loop_exit
    _

// kernel: transformer_forward.5
$region0: #{transformer_forward.5}
  #allocation0 [shape = 'u32[]', space=smem, size = 0x4, offset = 0x4, fixed_abs, tag = 'smem constant byte address 0x4 - core index']
  #allocation1 [shape = 'u32[144,128]{1,0:T(1,128)}', space=vmem, size = 0x12000, scoped, tag = 'internal scratch']
  #allocation2 [shape = 'f32[16,4]{1,0:T(8,128)}', space=vmem, size = 0x2000, scoped, tag = 'scratch operand']
  %s0 = inlined_call_operand.vmem [shape: f32[16,32], index: 0, kind: input, shape index: {}]
  %s1 = inlined_call_operand.vmem [shape: bf16[32,4], index: 1, kind: input, shape index: {}]
  %s2 = inlined_call_operand.vmem [shape: f32[1,4], index: 2, kind: input, shape index: {}]
  %s3 = inlined_call_operand.vmem [shape: f32[16,4], index: 3, kind: output, shape index: {}]
  %s4 = sld [smem:[#allocation0]]
  $region30: #{transformer_forward.5} parent=0
    _
  %s6 = ssub.s32 1, %s4
  %s7 = scalar_select 0, %s6, %s4
  // Predicated region
  $region2: #{transformer_forward.5} parent=0 // pred_check
    _
  $region3: #{transformer_forward.5} parent=0 // pred_check_branch
    %9 = sbr.rel (0) target = $region5
  $region4: #{transformer_forward.5} parent=0 // pred_region
    _
  $region5: #{transformer_forward.5} parent=0 // pred_fallthru
    _
  // Predicated region
  $region6: #{transformer_forward.5} parent=0 // pred_check
    _
  $region7: #{transformer_forward.5} parent=0 // pred_check_branch
    %11 = sbr.rel (0) target = $region9
  $region8: #{transformer_forward.5} parent=0 // pred_region
    _
  $region9: #{transformer_forward.5} parent=0 // pred_fallthru
    _
  // Predicated region
  $region10: #{transformer_forward.5} parent=0 // pred_check
    _
  $region11: #{transformer_forward.5} parent=0 // pred_check_branch
    %13 = sbr.rel (0) target = $region13
  $region12: #{transformer_forward.5} parent=0 // pred_region
    _
  $region13: #{transformer_forward.5} parent=0 // pred_fallthru
    _
  %p15 = scmp.eq.s32.totalorder 0, 0
  // Predicated region
  $region14: #{transformer_forward.5} parent=0 // pred_check
    %p16 = pneg %p15
  $region15: #{transformer_forward.5} parent=0 // pred_check_branch
    %18 = sbr.rel (%p16) target = $region17
  $region16: #{transformer_forward.5} parent=0 // pred_region
    %vm19 = vcmask 31744
    %20 = vst.msk [vmem:[#allocation2] sm:$0xff] %vm19, 0.0
    %21 = vst.msk [vmem:[#allocation2 + $0x8] sm:$0xff] %vm19, 0.0
  $region17: #{transformer_forward.5} parent=0 // pred_fallthru
    _
  %v22 = vld [vmem:[#allocation2] sm:$0xff]
  %v23 = vld [vmem:[#allocation2 + $0x8] sm:$0xff]
  %v24 = vld [vmem:[%s0] sm:$0xff]
  %v25 = vld [vmem:[%s0 + $0x8] sm:$0xff]
  %v26 = vpack.c.bf16 %v25, %v24
  %v27 = vld [vmem:[%s1] sm:$0xf]
  %v28 = vld [vmem:[%s1 + $0x4] sm:$0xf]
  %v29 = vld [vmem:[%s1 + $0x8] sm:$0xf]
  %v30 = vld [vmem:[%s1 + $0xc] sm:$0xf]
  %v35 = vunpack.c.l.b16 %v27
  %v36 = vunpack.c.l.b16 %v28
  %v37 = vunpack.c.l.b16 %v29
  %v38 = vunpack.c.l.b16 %v30
  %v39 = vpack.c.b16 %v36, %v35
  %v40 = vpack.c.b16 %v38, %v37
  %vm43 = vcmask 261120
  %v45 = vsel %vm43, %v26, 0
  %47 = vmatprep.subr.bf16.mxu0 0
  %48 = vmatpush1.bf16.msra.mxu0 0
  %49 = vmatprep.subr.bf16.mxu0 0
  %50 = vmatpush1.bf16.msra.mxu0 0
  %51 = vmatprep.subr.bf16.mxu0 0
  %52 = vmatpush1.bf16.msra.mxu0 0
  %53 = vmatprep.subr.bf16.mxu0 0
  %54 = vmatpush1.bf16.msra.mxu0 0
  %55 = vmatprep.subr.bf16.mxu0 0
  %56 = vmatpush1.bf16.msra.mxu0 0
  %57 = vmatprep.subr.bf16.mxu0 0
  %58 = vmatpush1.bf16.msra.mxu0 0
  %59 = vmatprep.subr.bf16.mxu0 0
  %60 = vmatpush1.bf16.msra.mxu0 %v40
  %61 = vmatprep.subr.bf16.mxu0 0
  %62 = vmatpush1.bf16.msra.mxu0 %v39
  %63 = vmatprep.subr.bf16.mxu0 0
  %64 = vmatpush2.bf16.msra.mxu0 0
  %65 = vmatprep.subr.bf16.mxu0 0
  %66 = vmatpush2.bf16.msra.mxu0 0
  %67 = vmatprep.subr.bf16.mxu0 0
  %68 = vmatpush2.bf16.msra.mxu0 0
  %69 = vmatprep.subr.bf16.mxu0 0
  %70 = vmatpush2.bf16.msra.mxu0 0
  %71 = vmatprep.subr.bf16.mxu0 0
  %72 = vmatpush2.bf16.msra.mxu0 0
  %73 = vmatprep.subr.bf16.mxu0 0
  %74 = vmatpush2.bf16.msra.mxu0 0
  %75 = vmatprep.subr.bf16.mxu0 0
  %76 = vmatpush2.bf16.msra.mxu0 0
  %77 = vmatprep.subr.bf16.mxu0 0
  %78 = vmatpush2.bf16.msra.mxu0 0
  %79 = vmatprep.mubr.bf16.mxu0 0
  %80 = vmatmul.mubr.bf16.gmra.mxu0 %v45
  %v81 = vpop.f32.mrf.mxu0
  %v82 = vadd.f32 0.0, %v81
  %v83 = vpop.f32.mrf.mxu0
  %v84 = vpop.f32.mrf.mxu0
  %v85 = vadd.f32 0.0, %v84
  %v86 = vpop.f32.mrf.mxu0
  %87 = vdwg.mxu0
  %v88 = vadd.f32 %v22, %v82
  %v89 = vadd.f32 %v23, %v85
  %vm90 = vcmask 31744
  %91 = vst.msk [vmem:[#allocation2] sm:$0xff] %vm90, %v88
  %92 = vst.msk [vmem:[#allocation2 + $0x8] sm:$0xff] %vm90, %v89
  // Predicated region
  $region18: #{transformer_forward.5} parent=0 // pred_check
    %p93 = pneg %p15
  $region19: #{transformer_forward.5} parent=0 // pred_check_branch
    %95 = sbr.rel (%p93) target = $region21
  $region20: #{transformer_forward.5} parent=0 // pred_region
    %v96 = vld [vmem:[#allocation2] sm:$0xff]
    %v97 = vld [vmem:[#allocation2 + $0x8] sm:$0xff]
    %v98 = vld [vmem:[%s2] sm:$0x1]
    %v100 = vlaneseq
    %v101 = vshrl.u32 %v100, 7
    %v102 = vsub.s32 0, %v101
    %v103 = vrot.slane %v98, %v102
    %v105 = vadd.f32 %v96, %v103
    %v106 = vadd.f32 %v97, %v103
    %107 = vst.msk [vmem:[%s3] sm:$0xff] %vm90, %v105
    %108 = vst.msk [vmem:[%s3 + $0x8] sm:$0xff] %vm90, %v106
  $region21: #{transformer_forward.5} parent=0 // pred_fallthru
    _
  // Predicated region
  $region22: #{transformer_forward.5} parent=0 // pred_check
    _
  $region23: #{transformer_forward.5} parent=0 // pred_check_branch
    %110 = sbr.rel (0) target = $region25
  $region24: #{transformer_forward.5} parent=0 // pred_region
    _
  $region25: #{transformer_forward.5} parent=0 // pred_fallthru
    _
  // Predicated region
  $region26: #{transformer_forward.5} parent=0 // pred_check
    _
  $region27: #{transformer_forward.5} parent=0 // pred_check_branch
    %112 = sbr.rel (0) target = $region29
  $region28: #{transformer_forward.5} parent=0 // pred_region
    _
  $region29: #{transformer_forward.5} parent=0 // pred_fallthru
    _

// kernel: transformer_forward.4
$region0: #{transformer_forward.4}
  #allocation0 [shape = 'u32[]', space=smem, size = 0x4, offset = 0x4, fixed_abs, tag = 'smem constant byte address 0x4 - core index']
  #allocation1 [shape = 'u32[144,128]{1,0:T(1,128)}', space=vmem, size = 0x12000, scoped, tag = 'internal scratch']
  #allocation2 [shape = 'f32[8,32]{1,0:T(8,128)}', space=vmem, size = 0x1000, scoped, tag = 'scratch operand']
  %s0 = inlined_call_operand.vmem [shape: f32[2,8,32], index: 0, kind: input, shape index: {}]
  %s1 = inlined_call_operand.vmem [shape: bf16[2,32,96], index: 1, kind: input, shape index: {}]
  %s2 = inlined_call_operand.vmem [shape: f32[2,1,96], index: 2, kind: input, shape index: {}]
  %s3 = inlined_call_operand.vmem [shape: bf16[2,32,32], index: 3, kind: input, shape index: {}]
  %s4 = inlined_call_operand.vmem [shape: f32[2,1,32], index: 4, kind: input, shape index: {}]
  %s5 = inlined_call_operand.vmem [shape: f32[2,1,32], index: 5, kind: input, shape index: {}]
  %s6 = inlined_call_operand.vmem [shape: f32[2,1,32], index: 6, kind: input, shape index: {}]
  %s7 = inlined_call_operand.vmem [shape: bf16[2,32,128], index: 7, kind: input, shape index: {}]
  %s8 = inlined_call_operand.vmem [shape: f32[2,1,128], index: 8, kind: input, shape index: {}]
  %s9 = inlined_call_operand.vmem [shape: bf16[2,128,32], index: 9, kind: input, shape index: {}]
  %s10 = inlined_call_operand.vmem [shape: f32[2,1,32], index: 10, kind: input, shape index: {}]
  %s11 = inlined_call_operand.vmem [shape: f32[2,1,32], index: 11, kind: input, shape index: {}]
  %s12 = inlined_call_operand.vmem [shape: f32[2,1,32], index: 12, kind: input, shape index: {}]
  %s13 = inlined_call_operand.vmem [shape: f32[2,8,32], index: 13, kind: output, shape index: {}]
  %s14 = sld [smem:[#allocation0]]
  $region93: #{transformer_forward.4} parent=0
    _
  %s16 = ssub.s32 1, %s14
  %s17 = scalar_select 0, %s16, %s14
  loop: start=0, step=1, limit=6
  $region2: #{transformer_forward.4} parent=0 // loop_pre_header
    _
  $region3: #{transformer_forward.4} parent=0 // loop_header
    %s19 = sphi 0, %s23
    %p20 = scmp.ge.s32.totalorder %s19, 6
    %s26 = sphi 0, %s38
    %s27 = sphi 0, %s34
    %s28 = sphi 0, %s26
    %s29 = sphi 0, %s27
    %s30 = sphi 0, %s28
    %s31 = sphi 0, %s29
    %s41 = sphi 0, %s43
    %s44 = sphi 0, %s41
    %s45 = sphi 0, %s44
    %s61 = sphi 0, %s45
    %s67 = sphi 0, %s69
    %s70 = sphi 0, %s67
    %s71 = sphi 0, %s70
    %s87 = sphi 0, %s71
    %s93 = sphi 0, %s95
    %s96 = sphi 0, %s93
    %s97 = sphi 0, %s96
    %s113 = sphi 0, %s97
    %s119 = sphi 0, %s121
    %s122 = sphi 0, %s119
    %s123 = sphi 0, %s122
    %s139 = sphi 0, %s123
    %s145 = sphi 0, %s147
    %s148 = sphi 0, %s145
    %s149 = sphi 0, %s148
    %s165 = sphi 0, %s149
    %s171 = sphi 0, %s173
    %s174 = sphi 0, %s171
    %s175 = sphi 0, %s174
    %s191 = sphi 0, %s175
    %s197 = sphi 0, %s199
    %s200 = sphi 0, %s197
    %s201 = sphi 0, %s200
    %s217 = sphi 0, %s201
    %s223 = sphi 0, %s225
    %s226 = sphi 0, %s223
    %s227 = sphi 0, %s226
    %s243 = sphi 0, %s227
    %s249 = sphi 0, %s251
    %s252 = sphi 0, %s249
    %s253 = sphi 0, %s252
    %s269 = sphi 0, %s253
    %s275 = sphi 0, %s277
    %s278 = sphi 0, %s275
    %s279 = sphi 0, %s278
    %s295 = sphi 0, %s279
    %s301 = sphi 0, %s303
    %s304 = sphi 0, %s301
    %s305 = sphi 0, %s304
    %s321 = sphi 0, %s305
    %s327 = sphi 0, %s329
    %s330 = sphi 0, %s327
    %s331 = sphi 0, %s330
    %s347 = sphi 0, %s331
    %s353 = sphi 0, %s355
    %s356 = sphi 0, %s353
    %s357 = sphi 0, %s356
    %s373 = sphi 0, %s357
    %s379 = sphi 0, %s381
    %s382 = sphi 0, %s379
    %s383 = sphi 0, %s382
    %s399 = sphi 0, %s383
  $region4: #{transformer_forward.4} parent=0 // loop_header_branch
    %22 = sbr.rel (%p20) target = $region8
  $region5: #{transformer_forward.4} parent=0 // loop_body
    %s24 = ssub.s32 %s19, 1
    %s25 = ssub.s32 %s19, 2
    %s32 = sadd.s32 1, %s27
    %p33 = scmp.ge.s32.totalorder %s32, 2
    %s34 = scalar_select %p33, 0, %s32
    %s35 = sadd.s32 1, %s26
    %s36 = scalar_select %p33, %s35, %s26
    %p37 = scmp.ge.s32.totalorder %s36, 2
    %s38 = scalar_select %p37, 0, %s36
    %s39 = ssub.s32 %s26, %s38
    %p40 = scmp.eq.s32.totalorder %s39, 0
    %s42 = sadd.s32 %s41, 1
    %s43 = scalar_select %p40, %s41, %s42
    %p46 = pneg %p40
    %p47 = scmp.eq.s32.totalorder %s19, 3
    %p48 = por %p46, %p47
    %p49 = scmp.ne.s32.totalorder %s41, %s44
    %p50 = scmp.eq.s32.totalorder %s19, 0
    %p51 = por %p49, %p50
    %p52 = scmp.ne.s32.totalorder %s41, %s44
    %p53 = scmp.eq.s32.totalorder %s24, 3
    %p54 = por %p52, %p53
    %p55 = scmp.ne.s32.totalorder %s44, %s45
    %p56 = scmp.eq.s32.totalorder %s24, 0
    %p57 = por %p55, %p56
    %p58 = scmp.ne.s32.totalorder %s44, %s45
    %p59 = scmp.eq.s32.totalorder %s25, 3
    %p60 = por %p58, %p59
    %p62 = scmp.ne.s32.totalorder %s45, %s61
    %p63 = scmp.eq.s32.totalorder %s25, 0
    %p64 = por %p62, %p63
    %s65 = ssub.s32 %s27, %s34
    %p66 = scmp.eq.s32.totalorder %s65, 0
    %s68 = sadd.s32 %s67, 1
    %s69 = scalar_select %p66, %s67, %s68
    %p72 = pneg %p66
    %p73 = scmp.eq.s32.totalorder %s19, 3
    %p74 = por %p72, %p73
    %p75 = scmp.ne.s32.totalorder %s67, %s70
    %p76 = scmp.eq.s32.totalorder %s19, 0
    %p77 = por %p75, %p76
    %p78 = scmp.ne.s32.totalorder %s67, %s70
    %p79 = scmp.eq.s32.totalorder %s24, 3
    %p80 = por %p78, %p79
    %p81 = scmp.ne.s32.totalorder %s70, %s71
    %p82 = scmp.eq.s32.totalorder %s24, 0
    %p83 = por %p81, %p82
    %p84 = scmp.ne.s32.totalorder %s70, %s71
    %p85 = scmp.eq.s32.totalorder %s25, 3
    %p86 = por %p84, %p85
    %p88 = scmp.ne.s32.totalorder %s71, %s87
    %p89 = scmp.eq.s32.totalorder %s25, 0
    %p90 = por %p88, %p89
    %s91 = ssub.s32 %s27, %s34
    %p92 = scmp.eq.s32.totalorder %s91, 0
    %s94 = sadd.s32 %s93, 1
    %s95 = scalar_select %p92, %s93, %s94
    %p98 = pneg %p92
    %p99 = scmp.eq.s32.totalorder %s19, 3
    %p100 = por %p98, %p99
    %p101 = scmp.ne.s32.totalorder %s93, %s96
    %p102 = scmp.eq.s32.totalorder %s19, 0
    %p103 = por %p101, %p102
    %p104 = scmp.ne.s32.totalorder %s93, %s96
    %p105 = scmp.eq.s32.totalorder %s24, 3
    %p106 = por %p104, %p105
    %p107 = scmp.ne.s32.totalorder %s96, %s97
    %p108 = scmp.eq.s32.totalorder %s24, 0
    %p109 = por %p107, %p108
    %p110 = scmp.ne.s32.totalorder %s96, %s97
    %p111 = scmp.eq.s32.totalorder %s25, 3
    %p112 = por %p110, %p111
    %p114 = scmp.ne.s32.totalorder %s97, %s113
    %p115 = scmp.eq.s32.totalorder %s25, 0
    %p116 = por %p114, %p115
    %s117 = ssub.s32 %s27, %s34
    %p118 = scmp.eq.s32.totalorder %s117, 0
    %s120 = sadd.s32 %s119, 1
    %s121 = scalar_select %p118, %s119, %s120
    %p124 = pneg %p118
    %p125 = scmp.eq.s32.totalorder %s19, 3
    %p126 = por %p124, %p125
    %p127 = scmp.ne.s32.totalorder %s119, %s122
    %p128 = scmp.eq.s32.totalorder %s19, 0
    %p129 = por %p127, %p128
    %p130 = scmp.ne.s32.totalorder %s119, %s122
    %p131 = scmp.eq.s32.totalorder %s24, 3
    %p132 = por %p130, %p131
    %p133 = scmp.ne.s32.totalorder %s122, %s123
    %p134 = scmp.eq.s32.totalorder %s24, 0
    %p135 = por %p133, %p134
    %p136 = scmp.ne.s32.totalorder %s122, %s123
    %p137 = scmp.eq.s32.totalorder %s25, 3
    %p138 = por %p136, %p137
    %p140 = scmp.ne.s32.totalorder %s123, %s139
    %p141 = scmp.eq.s32.totalorder %s25, 0
    %p142 = por %p140, %p141
    %s143 = ssub.s32 %s27, %s34
    %p144 = scmp.eq.s32.totalorder %s143, 0
    %s146 = sadd.s32 %s145, 1
    %s147 = scalar_select %p144, %s145, %s146
    %p150 = pneg %p144
    %p151 = scmp.eq.s32.totalorder %s19, 3
    %p152 = por %p150, %p151
    %p153 = scmp.ne.s32.totalorder %s145, %s148
    %p154 = scmp.eq.s32.totalorder %s19, 0
    %p155 = por %p153, %p154
    %p156 = scmp.ne.s32.totalorder %s145, %s148
    %p157 = scmp.eq.s32.totalorder %s24, 3
    %p158 = por %p156, %p157
    %p159 = scmp.ne.s32.totalorder %s148, %s149
    %p160 = scmp.eq.s32.totalorder %s24, 0
    %p161 = por %p159, %p160
    %p162 = scmp.ne.s32.totalorder %s148, %s149
    %p163 = scmp.eq.s32.totalorder %s25, 3
    %p164 = por %p162, %p163
    %p166 = scmp.ne.s32.totalorder %s149, %s165
    %p167 = scmp.eq.s32.totalorder %s25, 0
    %p168 = por %p166, %p167
    %s169 = ssub.s32 %s27, %s34
    %p170 = scmp.eq.s32.totalorder %s169, 0
    %s172 = sadd.s32 %s171, 1
    %s173 = scalar_select %p170, %s171, %s172
    %p176 = pneg %p170
    %p177 = scmp.eq.s32.totalorder %s19, 3
    %p178 = por %p176, %p177
    %p179 = scmp.ne.s32.totalorder %s171, %s174
    %p180 = scmp.eq.s32.totalorder %s19, 0
    %p181 = por %p179, %p180
    %p182 = scmp.ne.s32.totalorder %s171, %s174
    %p183 = scmp.eq.s32.totalorder %s24, 3
    %p184 = por %p182, %p183
    %p185 = scmp.ne.s32.totalorder %s174, %s175
    %p186 = scmp.eq.s32.totalorder %s24, 0
    %p187 = por %p185, %p186
    %p188 = scmp.ne.s32.totalorder %s174, %s175
    %p189 = scmp.eq.s32.totalorder %s25, 3
    %p190 = por %p188, %p189
    %p192 = scmp.ne.s32.totalorder %s175, %s191
    %p193 = scmp.eq.s32.totalorder %s25, 0
    %p194 = por %p192, %p193
    %s195 = ssub.s32 %s27, %s34
    %p196 = scmp.eq.s32.totalorder %s195, 0
    %s198 = sadd.s32 %s197, 1
    %s199 = scalar_select %p196, %s197, %s198
    %p202 = pneg %p196
    %p203 = scmp.eq.s32.totalorder %s19, 3
    %p204 = por %p202, %p203
    %p205 = scmp.ne.s32.totalorder %s197, %s200
    %p206 = scmp.eq.s32.totalorder %s19, 0
    %p207 = por %p205, %p206
    %p208 = scmp.ne.s32.totalorder %s197, %s200
    %p209 = scmp.eq.s32.totalorder %s24, 3
    %p210 = por %p208, %p209
    %p211 = scmp.ne.s32.totalorder %s200, %s201
    %p212 = scmp.eq.s32.totalorder %s24, 0
    %p213 = por %p211, %p212
    %p214 = scmp.ne.s32.totalorder %s200, %s201
    %p215 = scmp.eq.s32.totalorder %s25, 3
    %p216 = por %p214, %p215
    %p218 = scmp.ne.s32.totalorder %s201, %s217
    %p219 = scmp.eq.s32.totalorder %s25, 0
    %p220 = por %p218, %p219
    %s221 = ssub.s32 %s27, %s34
    %p222 = scmp.eq.s32.totalorder %s221, 0
    %s224 = sadd.s32 %s223, 1
    %s225 = scalar_select %p222, %s223, %s224
    %p228 = pneg %p222
    %p229 = scmp.eq.s32.totalorder %s19, 3
    %p230 = por %p228, %p229
    %p231 = scmp.ne.s32.totalorder %s223, %s226
    %p232 = scmp.eq.s32.totalorder %s19, 0
    %p233 = por %p231, %p232
    %p234 = scmp.ne.s32.totalorder %s223, %s226
    %p235 = scmp.eq.s32.totalorder %s24, 3
    %p236 = por %p234, %p235
    %p237 = scmp.ne.s32.totalorder %s226, %s227
    %p238 = scmp.eq.s32.totalorder %s24, 0
    %p239 = por %p237, %p238
    %p240 = scmp.ne.s32.totalorder %s226, %s227
    %p241 = scmp.eq.s32.totalorder %s25, 3
    %p242 = por %p240, %p241
    %p244 = scmp.ne.s32.totalorder %s227, %s243
    %p245 = scmp.eq.s32.totalorder %s25, 0
    %p246 = por %p244, %p245
    %s247 = ssub.s32 %s27, %s34
    %p248 = scmp.eq.s32.totalorder %s247, 0
    %s250 = sadd.s32 %s249, 1
    %s251 = scalar_select %p248, %s249, %s250
    %p254 = pneg %p248
    %p255 = scmp.eq.s32.totalorder %s19, 3
    %p256 = por %p254, %p255
    %p257 = scmp.ne.s32.totalorder %s249, %s252
    %p258 = scmp.eq.s32.totalorder %s19, 0
    %p259 = por %p257, %p258
    %p260 = scmp.ne.s32.totalorder %s249, %s252
    %p261 = scmp.eq.s32.totalorder %s24, 3
    %p262 = por %p260, %p261
    %p263 = scmp.ne.s32.totalorder %s252, %s253
    %p264 = scmp.eq.s32.totalorder %s24, 0
    %p265 = por %p263, %p264
    %p266 = scmp.ne.s32.totalorder %s252, %s253
    %p267 = scmp.eq.s32.totalorder %s25, 3
    %p268 = por %p266, %p267
    %p270 = scmp.ne.s32.totalorder %s253, %s269
    %p271 = scmp.eq.s32.totalorder %s25, 0
    %p272 = por %p270, %p271
    %s273 = ssub.s32 %s27, %s34
    %p274 = scmp.eq.s32.totalorder %s273, 0
    %s276 = sadd.s32 %s275, 1
    %s277 = scalar_select %p274, %s275, %s276
    %p280 = pneg %p274
    %p281 = scmp.eq.s32.totalorder %s19, 3
    %p282 = por %p280, %p281
    %p283 = scmp.ne.s32.totalorder %s275, %s278
    %p284 = scmp.eq.s32.totalorder %s19, 0
    %p285 = por %p283, %p284
    %p286 = scmp.ne.s32.totalorder %s275, %s278
    %p287 = scmp.eq.s32.totalorder %s24, 3
    %p288 = por %p286, %p287
    %p289 = scmp.ne.s32.totalorder %s278, %s279
    %p290 = scmp.eq.s32.totalorder %s24, 0
    %p291 = por %p289, %p290
    %p292 = scmp.ne.s32.totalorder %s278, %s279
    %p293 = scmp.eq.s32.totalorder %s25, 3
    %p294 = por %p292, %p293
    %p296 = scmp.ne.s32.totalorder %s279, %s295
    %p297 = scmp.eq.s32.totalorder %s25, 0
    %p298 = por %p296, %p297
    %s299 = ssub.s32 %s27, %s34
    %p300 = scmp.eq.s32.totalorder %s299, 0
    %s302 = sadd.s32 %s301, 1
    %s303 = scalar_select %p300, %s301, %s302
    %p306 = pneg %p300
    %p307 = scmp.eq.s32.totalorder %s19, 3
    %p308 = por %p306, %p307
    %p309 = scmp.ne.s32.totalorder %s301, %s304
    %p310 = scmp.eq.s32.totalorder %s19, 0
    %p311 = por %p309, %p310
    %p312 = scmp.ne.s32.totalorder %s301, %s304
    %p313 = scmp.eq.s32.totalorder %s24, 3
    %p314 = por %p312, %p313
    %p315 = scmp.ne.s32.totalorder %s304, %s305
    %p316 = scmp.eq.s32.totalorder %s24, 0
    %p317 = por %p315, %p316
    %p318 = scmp.ne.s32.totalorder %s304, %s305
    %p319 = scmp.eq.s32.totalorder %s25, 3
    %p320 = por %p318, %p319
    %p322 = scmp.ne.s32.totalorder %s305, %s321
    %p323 = scmp.eq.s32.totalorder %s25, 0
    %p324 = por %p322, %p323
    %s325 = ssub.s32 %s27, %s34
    %p326 = scmp.eq.s32.totalorder %s325, 0
    %s328 = sadd.s32 %s327, 1
    %s329 = scalar_select %p326, %s327, %s328
    %p332 = pneg %p326
    %p333 = scmp.eq.s32.totalorder %s19, 3
    %p334 = por %p332, %p333
    %p335 = scmp.ne.s32.totalorder %s327, %s330
    %p336 = scmp.eq.s32.totalorder %s19, 0
    %p337 = por %p335, %p336
    %p338 = scmp.ne.s32.totalorder %s327, %s330
    %p339 = scmp.eq.s32.totalorder %s24, 3
    %p340 = por %p338, %p339
    %p341 = scmp.ne.s32.totalorder %s330, %s331
    %p342 = scmp.eq.s32.totalorder %s24, 0
    %p343 = por %p341, %p342
    %p344 = scmp.ne.s32.totalorder %s330, %s331
    %p345 = scmp.eq.s32.totalorder %s25, 3
    %p346 = por %p344, %p345
    %p348 = scmp.ne.s32.totalorder %s331, %s347
    %p349 = scmp.eq.s32.totalorder %s25, 0
    %p350 = por %p348, %p349
    %s351 = ssub.s32 %s27, %s34
    %p352 = scmp.eq.s32.totalorder %s351, 0
    %s354 = sadd.s32 %s353, 1
    %s355 = scalar_select %p352, %s353, %s354
    %p358 = pneg %p352
    %p359 = scmp.eq.s32.totalorder %s19, 3
    %p360 = por %p358, %p359
    %p361 = scmp.ne.s32.totalorder %s353, %s356
    %p362 = scmp.eq.s32.totalorder %s19, 0
    %p363 = por %p361, %p362
    %p364 = scmp.ne.s32.totalorder %s353, %s356
    %p365 = scmp.eq.s32.totalorder %s24, 3
    %p366 = por %p364, %p365
    %p367 = scmp.ne.s32.totalorder %s356, %s357
    %p368 = scmp.eq.s32.totalorder %s24, 0
    %p369 = por %p367, %p368
    %p370 = scmp.ne.s32.totalorder %s356, %s357
    %p371 = scmp.eq.s32.totalorder %s25, 3
    %p372 = por %p370, %p371
    %p374 = scmp.ne.s32.totalorder %s357, %s373
    %p375 = scmp.eq.s32.totalorder %s25, 0
    %p376 = por %p374, %p375
    %s377 = ssub.s32 %s26, %s38
    %p378 = scmp.eq.s32.totalorder %s377, 0
    %s380 = sadd.s32 %s379, 1
    %s381 = scalar_select %p378, %s379, %s380
    %p384 = pneg %p378
    %p385 = scmp.eq.s32.totalorder %s19, 3
    %p386 = por %p384, %p385
    %p387 = scmp.ne.s32.totalorder %s379, %s382
    %p388 = scmp.eq.s32.totalorder %s19, 0
    %p389 = por %p387, %p388
    %p390 = scmp.ne.s32.totalorder %s379, %s382
    %p391 = scmp.eq.s32.totalorder %s24, 3
    %p392 = por %p390, %p391
    %p393 = scmp.ne.s32.totalorder %s382, %s383
    %p394 = scmp.eq.s32.totalorder %s24, 0
    %p395 = por %p393, %p394
    %p396 = scmp.ne.s32.totalorder %s382, %s383
    %p397 = scmp.eq.s32.totalorder %s25, 3
    %p398 = por %p396, %p397
    %p400 = scmp.ne.s32.totalorder %s383, %s399
    %p401 = scmp.eq.s32.totalorder %s25, 0
    %p402 = por %p400, %p401
    %p403 = scmp.le.s32.totalorder 1, %s19
    %p404 = scmp.lt.s32.totalorder %s19, 5
    %p405 = pnand %p403, %p404
    %p406 = pneg %p405
    // Predicated region
    $region9: #{transformer_forward.4} parent=5 // pred_check
      _
    $region10: #{transformer_forward.4} parent=5 // pred_check_branch
      %408 = sbr.rel (%p405) target = $region12
    $region11: #{transformer_forward.4} parent=5 // pred_region
      %s409 = ssub.s32 %s19, 1
    $region12: #{transformer_forward.4} parent=5 // pred_fallthru
      _
    %p410 = scmp.lt.s32.totalorder %s19, 4
    // Predicated region
    $region13: #{transformer_forward.4} parent=5 // pred_check
      %p411 = pneg %p410
    $region14: #{transformer_forward.4} parent=5 // pred_check_branch
      %413 = sbr.rel (%p411) target = $region16
    $region15: #{transformer_forward.4} parent=5 // pred_region
      // Predicated region
      $region17: #{transformer_forward.4} parent=15 // pred_check
        %p414 = pneg %p51
      $region18: #{transformer_forward.4} parent=15 // pred_check_branch
        %416 = sbr.rel (%p414) target = $region20
      $region19: #{transformer_forward.4} parent=15 // pred_region
        %p417 = scmp.lt.s32.totalorder %s26, 1
        %s418 = scalar_select %p417, %s26, 1
        %s419 = smul.addr %s418, 8
        %s420 = scalar_lea.vmem %s0, %s419
      $region20: #{transformer_forward.4} parent=15 // pred_fallthru
        _
      // Predicated region
      $region21: #{transformer_forward.4} parent=15 // pred_check
        %p421 = pneg %p77
      $region22: #{transformer_forward.4} parent=15 // pred_check_branch
        %423 = sbr.rel (%p421) target = $region24
      $region23: #{transformer_forward.4} parent=15 // pred_region
        %p424 = scmp.lt.s32.totalorder %s27, 1
        %s425 = scalar_select %p424, %s27, 1
        %s426 = smul.addr %s425, 4
        %s427 = smul.addr %s426, 4
        %s428 = scalar_lea.vmem %s1, %s427
      $region24: #{transformer_forward.4} parent=15 // pred_fallthru
        _
      // Predicated region
      $region25: #{transformer_forward.4} parent=15 // pred_check
        %p429 = pneg %p103
      $region26: #{transformer_forward.4} parent=15 // pred_check_branch
        %431 = sbr.rel (%p429) target = $region28
      $region27: #{transformer_forward.4} parent=15 // pred_region
        %p432 = scmp.lt.s32.totalorder %s27, 1
        %s433 = scalar_select %p432, %s27, 1
        %s434 = scalar_lea.vmem %s2, %s433
      $region28: #{transformer_forward.4} parent=15 // pred_fallthru
        _
      // Predicated region
      $region29: #{transformer_forward.4} parent=15 // pred_check
        %p435 = pneg %p129
      $region30: #{transformer_forward.4} parent=15 // pred_check_branch
        %437 = sbr.rel (%p435) target = $region32
      $region31: #{transformer_forward.4} parent=15 // pred_region
        %p438 = scmp.lt.s32.totalorder %s27, 1
        %s439 = scalar_select %p438, %s27, 1
        %s440 = smul.addr %s439, 4
        %s441 = smul.addr %s440, 4
        %s442 = scalar_lea.vmem %s3, %s441
      $region32: #{transformer_forward.4} parent=15 // pred_fallthru
        _
      // Predicated region
      $region33: #{transformer_forward.4} parent=15 // pred_check
        %p443 = pneg %p155
      $region34: #{transformer_forward.4} parent=15 // pred_check_branch
        %445 = sbr.rel (%p443) target = $region36
      $region35: #{transformer_forward.4} parent=15 // pred_region
        %p446 = scmp.lt.s32.totalorder %s27, 1
        %s447 = scalar_select %p446, %s27, 1
        %s448 = scalar_lea.vmem %s4, %s447
      $region36: #{transformer_forward.4} parent=15 // pred_fallthru
        _
      // Predicated region
      $region37: #{transformer_forward.4} parent=15 // pred_check
        %p449 = pneg %p181
      $region38: #{transformer_forward.4} parent=15 // pred_check_branch
        %451 = sbr.rel (%p449) target = $region40
      $region39: #{transformer_forward.4} parent=15 // pred_region
        %p452 = scmp.lt.s32.totalorder %s27, 1
        %s453 = scalar_select %p452, %s27, 1
        %s454 = scalar_lea.vmem %s5, %s453
      $region40: #{transformer_forward.4} parent=15 // pred_fallthru
        _
      // Predicated region
      $region41: #{transformer_forward.4} parent=15 // pred_check
        %p455 = pneg %p207
      $region42: #{transformer_forward.4} parent=15 // pred_check_branch
        %457 = sbr.rel (%p455) target = $region44
      $region43: #{transformer_forward.4} parent=15 // pred_region
        %p458 = scmp.lt.s32.totalorder %s27, 1
        %s459 = scalar_select %p458, %s27, 1
        %s460 = scalar_lea.vmem %s6, %s459
      $region44: #{transformer_forward.4} parent=15 // pred_fallthru
        _
      // Predicated region
      $region45: #{transformer_forward.4} parent=15 // pred_check
        %p461 = pneg %p233
      $region46: #{transformer_forward.4} parent=15 // pred_check_branch
        %463 = sbr.rel (%p461) target = $region48
      $region47: #{transformer_forward.4} parent=15 // pred_region
        %p464 = scmp.lt.s32.totalorder %s27, 1
        %s465 = scalar_select %p464, %s27, 1
        %s466 = smul.addr %s465, 4
        %s467 = smul.addr %s466, 4
        %s468 = scalar_lea.vmem %s7, %s467
      $region48: #{transformer_forward.4} parent=15 // pred_fallthru
        _
      // Predicated region
      $region49: #{transformer_forward.4} parent=15 // pred_check
        %p469 = pneg %p259
      $region50: #{transformer_forward.4} parent=15 // pred_check_branch
        %471 = sbr.rel (%p469) target = $region52
      $region51: #{transformer_forward.4} parent=15 // pred_region
        %p472 = scmp.lt.s32.totalorder %s27, 1
        %s473 = scalar_select %p472, %s27, 1
        %s474 = scalar_lea.vmem %s8, %s473
      $region52: #{transformer_forward.4} parent=15 // pred_fallthru
        _
      // Predicated region
      $region53: #{transformer_forward.4} parent=15 // pred_check
        %p475 = pneg %p285
      $region54: #{transformer_forward.4} parent=15 // pred_check_branch
        %477 = sbr.rel (%p475) target = $region56
      $region55: #{transformer_forward.4} parent=15 // pred_region
        %p478 = scmp.lt.s32.totalorder %s27, 1
        %s479 = scalar_select %p478, %s27, 1
        %s480 = smul.addr %s479, 16
        %s481 = smul.addr %s480, 4
        %s482 = scalar_lea.vmem %s9, %s481
      $region56: #{transformer_forward.4} parent=15 // pred_fallthru
        _
      // Predicated region
      $region57: #{transformer_forward.4} parent=15 // pred_check
        %p483 = pneg %p311
      $region58: #{transformer_forward.4} parent=15 // pred_check_branch
        %485 = sbr.rel (%p483) target = $region60
      $region59: #{transformer_forward.4} parent=15 // pred_region
        %p486 = scmp.lt.s32.totalorder %s27, 1
        %s487 = scalar_select %p486, %s27, 1
        %s488 = scalar_lea.vmem %s10, %s487
      $region60: #{transformer_forward.4} parent=15 // pred_fallthru
        _
      // Predicated region
      $region61: #{transformer_forward.4} parent=15 // pred_check
        %p489 = pneg %p337
      $region62: #{transformer_forward.4} parent=15 // pred_check_branch
        %491 = sbr.rel (%p489) target = $region64
      $region63: #{transformer_forward.4} parent=15 // pred_region
        %p492 = scmp.lt.s32.totalorder %s27, 1
        %s493 = scalar_select %p492, %s27, 1
        %s494 = scalar_lea.vmem %s11, %s493
      $region64: #{transformer_forward.4} parent=15 // pred_fallthru
        _
      // Predicated region
      $region65: #{transformer_forward.4} parent=15 // pred_check
        %p495 = pneg %p363
      $region66: #{transformer_forward.4} parent=15 // pred_check_branch
        %497 = sbr.rel (%p495) target = $region68
      $region67: #{transformer_forward.4} parent=15 // pred_region
        %p498 = scmp.lt.s32.totalorder %s27, 1
        %s499 = scalar_select %p498, %s27, 1
        %s500 = scalar_lea.vmem %s12, %s499
      $region68: #{transformer_forward.4} parent=15 // pred_fallthru
        _
    $region16: #{transformer_forward.4} parent=5 // pred_fallthru
      _
    %p501 = scmp.le.s32.totalorder 1, %s19
    %p502 = scmp.lt.s32.totalorder %s19, 5
    %p503 = pnand %p501, %p502
    %p504 = pneg %p503
    // Predicated region
    $region69: #{transformer_forward.4} parent=5 // pred_check
      _
    $region70: #{transformer_forward.4} parent=5 // pred_check_branch
      %506 = sbr.rel (%p503) target = $region72
    $region71: #{transformer_forward.4} parent=5 // pred_region
      %s507 = ssub.s32 %s19, 1
      %p508 = scmp.lt.s32.totalorder %s28, 1
      %s509 = scalar_select %p508, %s28, 1
      %s510 = smul.addr %s509, 8
      %s511 = scalar_lea.vmem %s0, %s510
      %p512 = pneg %p57
      %p513 = pneg %p54
      %p514 = scmp.lt.s32.totalorder %s29, 1
      %s515 = scalar_select %p514, %s29, 1
      %s516 = smul.addr %s515, 4
      %s517 = smul.addr %s516, 4
      %s518 = scalar_lea.vmem %s1, %s517
      %p519 = pneg %p83
      %p520 = pneg %p80
      %p521 = scmp.lt.s32.totalorder %s29, 1
      %s522 = scalar_select %p521, %s29, 1
      %s523 = scalar_lea.vmem %s2, %s522
      %p524 = pneg %p109
      %p525 = pneg %p106
      %p526 = scmp.lt.s32.totalorder %s29, 1
      %s527 = scalar_select %p526, %s29, 1
      %s528 = smul.addr %s527, 4
      %s529 = smul.addr %s528, 4
      %s530 = scalar_lea.vmem %s3, %s529
      %p531 = pneg %p135
      %p532 = pneg %p132
      %p533 = scmp.lt.s32.totalorder %s29, 1
      %s534 = scalar_select %p533, %s29, 1
      %s535 = scalar_lea.vmem %s4, %s534
      %p536 = pneg %p161
      %p537 = pneg %p158
      %p538 = scmp.lt.s32.totalorder %s29, 1
      %s539 = scalar_select %p538, %s29, 1
      %s540 = scalar_lea.vmem %s5, %s539
      %p541 = pneg %p187
      %p542 = pneg %p184
      %p543 = scmp.lt.s32.totalorder %s29, 1
      %s544 = scalar_select %p543, %s29, 1
      %s545 = scalar_lea.vmem %s6, %s544
      %p546 = pneg %p213
      %p547 = pneg %p210
      %p548 = scmp.lt.s32.totalorder %s29, 1
      %s549 = scalar_select %p548, %s29, 1
      %s550 = smul.addr %s549, 4
      %s551 = smul.addr %s550, 4
      %s552 = scalar_lea.vmem %s7, %s551
      %p553 = pneg %p239
      %p554 = pneg %p236
      %p555 = scmp.lt.s32.totalorder %s29, 1
      %s556 = scalar_select %p555, %s29, 1
      %s557 = scalar_lea.vmem %s8, %s556
      %p558 = pneg %p265
      %p559 = pneg %p262
      %p560 = scmp.lt.s32.totalorder %s29, 1
      %s561 = scalar_select %p560, %s29, 1
      %s562 = smul.addr %s561, 16
      %s563 = smul.addr %s562, 4
      %s564 = scalar_lea.vmem %s9, %s563
      %p565 = pneg %p291
      %p566 = pneg %p288
      %p567 = scmp.lt.s32.totalorder %s29, 1
      %s568 = scalar_select %p567, %s29, 1
      %s569 = scalar_lea.vmem %s10, %s568
      %p570 = pneg %p317
      %p571 = pneg %p314
      %p572 = scmp.lt.s32.totalorder %s29, 1
      %s573 = scalar_select %p572, %s29, 1
      %s574 = scalar_lea.vmem %s11, %s573
      %p575 = pneg %p343
      %p576 = pneg %p340
      %p577 = scmp.lt.s32.totalorder %s29, 1
      %s578 = scalar_select %p577, %s29, 1
      %s579 = scalar_lea.vmem %s12, %s578
      %p580 = pneg %p369
      %p581 = pneg %p366
      %p582 = pneg %p395
      %p583 = pneg %p392
      %p584 = scmp.lt.s32.totalorder %s28, 1
      %s585 = scalar_select %p584, %s28, 1
      %s586 = smul.addr %s585, 8
      %s587 = scalar_lea.vmem %s13, %s586
      %p588 = scmp.lt.s32.totalorder %s28, 1
      %s589 = scalar_select %p588, %s28, 1
      %s590 = smul.addr %s589, 8
      %s591 = scalar_lea.vmem %s0, %s590
      %p592 = scmp.lt.s32.totalorder %s29, 1
      %s593 = scalar_select %p592, %s29, 1
      %s594 = smul.addr %s593, 4
      %s595 = smul.addr %s594, 4
      %s596 = scalar_lea.vmem %s1, %s595
      %p597 = scmp.lt.s32.totalorder %s29, 1
      %s598 = scalar_select %p597, %s29, 1
      %s599 = scalar_lea.vmem %s2, %s598
      %p600 = scmp.lt.s32.totalorder %s29, 1
      %s601 = scalar_select %p600, %s29, 1
      %s602 = smul.addr %s601, 4
      %s603 = smul.addr %s602, 4
      %s604 = scalar_lea.vmem %s3, %s603
      %p605 = scmp.lt.s32.totalorder %s29, 1
      %s606 = scalar_select %p605, %s29, 1
      %s607 = scalar_lea.vmem %s4, %s606
      %p608 = scmp.lt.s32.totalorder %s29, 1
      %s609 = scalar_select %p608, %s29, 1
      %s610 = scalar_lea.vmem %s5, %s609
      %p611 = scmp.lt.s32.totalorder %s29, 1
      %s612 = scalar_select %p611, %s29, 1
      %s613 = scalar_lea.vmem %s6, %s612
      %p614 = scmp.lt.s32.totalorder %s29, 1
      %s615 = scalar_select %p614, %s29, 1
      %s616 = smul.addr %s615, 4
      %s617 = smul.addr %s616, 4
      %s618 = scalar_lea.vmem %s7, %s617
      %p619 = scmp.lt.s32.totalorder %s29, 1
      %s620 = scalar_select %p619, %s29, 1
      %s621 = scalar_lea.vmem %s8, %s620
      %p622 = scmp.lt.s32.totalorder %s29, 1
      %s623 = scalar_select %p622, %s29, 1
      %s624 = smul.addr %s623, 16
      %s625 = smul.addr %s624, 4
      %s626 = scalar_lea.vmem %s9, %s625
      %p627 = scmp.lt.s32.totalorder %s29, 1
      %s628 = scalar_select %p627, %s29, 1
      %s629 = scalar_lea.vmem %s10, %s628
      %p630 = scmp.lt.s32.totalorder %s29, 1
      %s631 = scalar_select %p630, %s29, 1
      %s632 = scalar_lea.vmem %s11, %s631
      %p633 = scmp.lt.s32.totalorder %s29, 1
      %s634 = scalar_select %p633, %s29, 1
      %s635 = scalar_lea.vmem %s12, %s634
      %p636 = scmp.lt.s32.totalorder %s28, 1
      %s637 = scalar_select %p636, %s28, 1
      %s638 = smul.addr %s637, 8
      %s639 = scalar_lea.vmem %s13, %s638
      %p641 = scmp.eq.s32.totalorder %s29, 0
      // Predicated region
      $region73: #{transformer_forward.4} parent=71 // pred_check
        %p642 = pneg %p641
      $region74: #{transformer_forward.4} parent=71 // pred_check_branch
        %644 = sbr.rel (%p642) target = $region76
      $region75: #{transformer_forward.4} parent=71 // pred_region
        %v645 = vld [vmem:[%s591] sm:$0xff]
        %vm646 = vcmask 261120
        %647 = vst.msk [vmem:[#allocation2] sm:$0xff] %vm646, %v645
      $region76: #{transformer_forward.4} parent=71 // pred_fallthru
        _
      %v648 = vld [vmem:[#allocation2] sm:$0xff]
      %v649 = vpack.c.bf16 %v648, %v648
      %v650 = vld [vmem:[%s596] sm:$0xf]
      %v651 = vld [vmem:[%s596 + $0x4] sm:$0xf]
      %v652 = vld [vmem:[%s596 + $0x8] sm:$0xf]
      %v653 = vld [vmem:[%s596 + $0xc] sm:$0xf]
      %v654 = vld [vmem:[%s599] sm:$0x1]
      %v656 = vlaneseq
      %v657 = vshrl.u32 %v656, 7
      %v658 = vsub.s32 0, %v657
      %v659 = vrot.slane %v654, %v658
      %v665 = vunpack.c.l.b16 %v650
      %v666 = vunpack.c.l.b16 %v651
      %v667 = vunpack.c.l.b16 %v652
      %v668 = vunpack.c.l.b16 %v653
      %v669 = vpack.c.b16 %v666, %v665
      %v670 = vpack.c.b16 %v668, %v667
      %vm673 = vcmask 261120
      %v675 = vsel %vm673, %v649, 0
      %677 = vmatprep.subr.bf16.mxu0 0
      %678 = vmatpush1.bf16.msra.mxu0 0
      %679 = vmatprep.subr.bf16.mxu0 0
      %680 = vmatpush1.bf16.msra.mxu0 0
      %681 = vmatprep.subr.bf16.mxu0 0
      %682 = vmatpush1.bf16.msra.mxu0 0
      %683 = vmatprep.subr.bf16.mxu0 0
      %684 = vmatpush1.bf16.msra.mxu0 0
      %685 = vmatprep.subr.bf16.mxu0 0
      %686 = vmatpush1.bf16.msra.mxu0 0
      %687 = vmatprep.subr.bf16.mxu0 0
      %688 = vmatpush1.bf16.msra.mxu0 0
      %689 = vmatprep.subr.bf16.mxu0 0
      %690 = vmatpush1.bf16.msra.mxu0 %v670
      %691 = vmatprep.subr.bf16.mxu0 0
      %692 = vmatpush1.bf16.msra.mxu0 %v669
      %693 = vmatprep.subr.bf16.mxu0 0
      %694 = vmatpush2.bf16.msra.mxu0 0
      %695 = vmatprep.subr.bf16.mxu0 0
      %696 = vmatpush2.bf16.msra.mxu0 0
      %697 = vmatprep.subr.bf16.mxu0 0
      %698 = vmatpush2.bf16.msra.mxu0 0
      %699 = vmatprep.subr.bf16.mxu0 0
      %700 = vmatpush2.bf16.msra.mxu0 0
      %701 = vmatprep.subr.bf16.mxu0 0
      %702 = vmatpush2.bf16.msra.mxu0 0
      %703 = vmatprep.subr.bf16.mxu0 0
      %704 = vmatpush2.bf16.msra.mxu0 0
      %705 = vmatprep.subr.bf16.mxu0 0
      %706 = vmatpush2.bf16.msra.mxu0 0
      %707 = vmatprep.subr.bf16.mxu0 0
      %708 = vmatpush2.bf16.msra.mxu0 0
      %709 = vmatprep.mubr.bf16.mxu0 0
      %710 = vmatmul.mubr.bf16.gmra.mxu0 %v675
      %v711 = vpop.f32.mrf.mxu0
      %v712 = vadd.f32 %v659, %v711
      %v713 = vpop.f32.mrf.mxu0
      %v714 = vpop.f32.mrf.mxu0
      %v715 = vpop.f32.mrf.mxu0
      %716 = vdwg.mxu0
      %v717 = vmul.f32 %v712, 0.35355338
      %v718 = vpack.c.bf16 %v717, %v717
      %v719 = vpack.c.bf16 %v712, %v712
      %721 = vrot.lane.b32.xlu0 %v719, 96
      %v722 = vpop.permute.xlu0 %721
      %vm723 = vcmask 64512
      %v725 = vsel %vm723, %v718, 0
      %v728 = vsel %vm723, %v722, 0
      %730 = vmatprep.subr.bf16.mxu0 0
      %731 = vmatpush1.bf16.xpose.msra.mxu0 0
      %732 = vmatprep.subr.bf16.mxu0 0
      %733 = vmatpush1.bf16.xpose.msra.mxu0 0
      %734 = vmatprep.subr.bf16.mxu0 0
      %735 = vmatpush1.bf16.xpose.msra.mxu0 0
      %736 = vmatprep.subr.bf16.mxu0 0
      %737 = vmatpush1.bf16.xpose.msra.mxu0 0
      %738 = vmatprep.subr.bf16.mxu0 0
      %739 = vmatpush1.bf16.xpose.msra.mxu0 0
      %740 = vmatprep.subr.bf16.mxu0 0
      %741 = vmatpush1.bf16.xpose.msra.mxu0 0
      %742 = vmatprep.subr.bf16.mxu0 0
      %743 = vmatpush1.bf16.xpose.msra.mxu0 0
      %744 = vmatprep.subr.bf16.mxu0 0
      %745 = vmatpush1.bf16.xpose.msra.mxu0 %v728
      %746 = vmatprep.subr.bf16.mxu0 0
      %747 = vmatpush2.bf16.xpose.msra.mxu0 0
      %748 = vmatprep.subr.bf16.mxu0 0
      %749 = vmatpush2.bf16.xpose.msra.mxu0 0
      %750 = vmatprep.subr.bf16.mxu0 0
      %751 = vmatpush2.bf16.xpose.msra.mxu0 0
      %752 = vmatprep.subr.bf16.mxu0 0
      %753 = vmatpush2.bf16.xpose.msra.mxu0 0
      %754 = vmatprep.subr.bf16.mxu0 0
      %755 = vmatpush2.bf16.xpose.msra.mxu0 0
      %756 = vmatprep.subr.bf16.mxu0 0
      %757 = vmatpush2.bf16.xpose.msra.mxu0 0
      %758 = vmatprep.subr.bf16.mxu0 0
      %759 = vmatpush2.bf16.xpose.msra.mxu0 0
      %760 = vmatprep.subr.bf16.mxu0 0
      %761 = vmatpush2.bf16.xpose.msra.mxu0 0
      %762 = vmatprep.mubr.bf16.mxu0 0
      %763 = vmatmul.mubr.bf16.gmra.mxu0 %v725
      %v764 = vpop.f32.mrf.mxu0
      %v765 = vadd.f32 0.0, %v764
      %v766 = vpop.f32.mrf.mxu0
      %v767 = vpop.f32.mrf.mxu0
      %v768 = vpop.f32.mrf.mxu0
      %769 = vdwg.mxu0
      %v770 = vsel %vm723, %v765, -inf
      %771 = vmax.xlane.f32.xlu0 %v770
      %v772 = vpop.xlane.xlu0 %771
      %v773 = vsub.f32 %v765, %v772
      %v774 = vmul.f32 %v773, 1.442695
      %v775 = vpow.pop %v774
      %v776 = vsel %vm723, %v775, 0.0
      %777 = vadd.xlane.f32.xlu0 %v776
      %v778 = vpop.xlane.xlu0 %777
      %v779 = vrcp.pop %v778
      %v780 = vmul.f32 %v775, %v779
      %v781 = vpack.c.bf16 %v780, %v780
      %782 = vrot.lane.b32.xlu0 %v719, 64
      %v783 = vpop.permute.xlu0 %782
      %v785 = vsel %vm723, %v781, 0
      %vm787 = vcmask 1043456
      %v789 = vsel %vm787, %v783, 0
      %791 = vmatprep.subr.bf16.mxu0 0
      %792 = vmatpush1.bf16.msra.mxu0 0
      %793 = vmatprep.subr.bf16.mxu0 0
      %794 = vmatpush1.bf16.msra.mxu0 0
      %795 = vmatprep.subr.bf16.mxu0 0
      %796 = vmatpush1.bf16.msra.mxu0 0
      %797 = vmatprep.subr.bf16.mxu0 0
      %798 = vmatpush1.bf16.msra.mxu0 0
      %799 = vmatprep.subr.bf16.mxu0 0
      %800 = vmatpush1.bf16.msra.mxu0 0
      %801 = vmatprep.subr.bf16.mxu0 0
      %802 = vmatpush1.bf16.msra.mxu0 0
      %803 = vmatprep.subr.bf16.mxu0 0
      %804 = vmatpush1.bf16.msra.mxu0 0
      %805 = vmatprep.subr.bf16.mxu0 0
      %806 = vmatpush1.bf16.msra.mxu0 %v789
      %807 = vmatprep.subr.bf16.mxu0 0
      %808 = vmatpush2.bf16.msra.mxu0 0
      %809 = vmatprep.subr.bf16.mxu0 0
      %810 = vmatpush2.bf16.msra.mxu0 0
      %811 = vmatprep.subr.bf16.mxu0 0
      %812 = vmatpush2.bf16.msra.mxu0 0
      %813 = vmatprep.subr.bf16.mxu0 0
      %814 = vmatpush2.bf16.msra.mxu0 0
      %815 = vmatprep.subr.bf16.mxu0 0
      %816 = vmatpush2.bf16.msra.mxu0 0
      %817 = vmatprep.subr.bf16.mxu0 0
      %818 = vmatpush2.bf16.msra.mxu0 0
      %819 = vmatprep.subr.bf16.mxu0 0
      %820 = vmatpush2.bf16.msra.mxu0 0
      %821 = vmatprep.subr.bf16.mxu0 0
      %822 = vmatpush2.bf16.msra.mxu0 0
      %823 = vmatprep.mubr.bf16.mxu0 0
      %824 = vmatmul.mubr.bf16.gmra.mxu0 %v785
      %v825 = vpop.f32.mrf.mxu0
      %v826 = vadd.f32 0.0, %v825
      %v827 = vpop.f32.mrf.mxu0
      %v828 = vpop.f32.mrf.mxu0
      %v829 = vpop.f32.mrf.mxu0
      %830 = vdwg.mxu0
      %832 = vrot.lane.b32.xlu0 %v718, 120
      %v833 = vpop.permute.xlu0 %832
      %834 = vrot.lane.b32.xlu0 %v719, 88
      %v835 = vpop.permute.xlu0 %834
      %v837 = vsel %vm723, %v833, 0
      %v840 = vsel %vm723, %v835, 0
      %842 = vmatprep.subr.bf16.mxu0 0
      %843 = vmatpush1.bf16.xpose.msra.mxu0 0
      %844 = vmatprep.subr.bf16.mxu0 0
      %845 = vmatpush1.bf16.xpose.msra.mxu0 0
      %846 = vmatprep.subr.bf16.mxu0 0
      %847 = vmatpush1.bf16.xpose.msra.mxu0 0
      %848 = vmatprep.subr.bf16.mxu0 0
      %849 = vmatpush1.bf16.xpose.msra.mxu0 0
      %850 = vmatprep.subr.bf16.mxu0 0
      %851 = vmatpush1.bf16.xpose.msra.mxu0 0
      %852 = vmatprep.subr.bf16.mxu0 0
      %853 = vmatpush1.bf16.xpose.msra.mxu0 0
      %854 = vmatprep.subr.bf16.mxu0 0
      %855 = vmatpush1.bf16.xpose.msra.mxu0 0
      %856 = vmatprep.subr.bf16.mxu0 0
      %857 = vmatpush1.bf16.xpose.msra.mxu0 %v840
      %858 = vmatprep.subr.bf16.mxu0 0
      %859 = vmatpush2.bf16.xpose.msra.mxu0 0
      %860 = vmatprep.subr.bf16.mxu0 0
      %861 = vmatpush2.bf16.xpose.msra.mxu0 0
      %862 = vmatprep.subr.bf16.mxu0 0
      %863 = vmatpush2.bf16.xpose.msra.mxu0 0
      %864 = vmatprep.subr.bf16.mxu0 0
      %865 = vmatpush2.bf16.xpose.msra.mxu0 0
      %866 = vmatprep.subr.bf16.mxu0 0
      %867 = vmatpush2.bf16.xpose.msra.mxu0 0
      %868 = vmatprep.subr.bf16.mxu0 0
      %869 = vmatpush2.bf16.xpose.msra.mxu0 0
      %870 = vmatprep.subr.bf16.mxu0 0
      %871 = vmatpush2.bf16.xpose.msra.mxu0 0
      %872 = vmatprep.subr.bf16.mxu0 0
      %873 = vmatpush2.bf16.xpose.msra.mxu0 0
      %874 = vmatprep.mubr.bf16.mxu0 0
      %875 = vmatmul.mubr.bf16.gmra.mxu0 %v837
      %v876 = vpop.f32.mrf.mxu0
      %v877 = vadd.f32 0.0, %v876
      %v878 = vpop.f32.mrf.mxu0
      %v879 = vpop.f32.mrf.mxu0
      %v880 = vpop.f32.mrf.mxu0
      %881 = vdwg.mxu0
      %v882 = vsel %vm723, %v877, -inf
      %883 = vmax.xlane.f32.xlu0 %v882
      %v884 = vpop.xlane.xlu0 %883
      %v885 = vsub.f32 %v877, %v884
      %v886 = vmul.f32 %v885, 1.442695
      %v887 = vpow.pop %v886
      %v888 = vsel %vm723, %v887, 0.0
      %889 = vadd.xlane.f32.xlu0 %v888
      %v890 = vpop.xlane.xlu0 %889
      %v891 = vrcp.pop %v890
      %v892 = vmul.f32 %v887, %v891
      %v893 = vpack.c.bf16 %v892, %v892
      %894 = vrot.lane.b32.xlu0 %v719, 56
      %v895 = vpop.permute.xlu0 %894
      %v897 = vsel %vm723, %v893, 0
      %v900 = vsel %vm787, %v895, 0
      %902 = vmatprep.subr.bf16.mxu0 0
      %903 = vmatpush1.bf16.msra.mxu0 0
      %904 = vmatprep.subr.bf16.mxu0 0
      %905 = vmatpush1.bf16.msra.mxu0 0
      %906 = vmatprep.subr.bf16.mxu0 0
      %907 = vmatpush1.bf16.msra.mxu0 0
      %908 = vmatprep.subr.bf16.mxu0 0
      %909 = vmatpush1.bf16.msra.mxu0 0
      %910 = vmatprep.subr.bf16.mxu0 0
      %911 = vmatpush1.bf16.msra.mxu0 0
      %912 = vmatprep.subr.bf16.mxu0 0
      %913 = vmatpush1.bf16.msra.mxu0 0
      %914 = vmatprep.subr.bf16.mxu0 0
      %915 = vmatpush1.bf16.msra.mxu0 0
      %916 = vmatprep.subr.bf16.mxu0 0
      %917 = vmatpush1.bf16.msra.mxu0 %v900
      %918 = vmatprep.subr.bf16.mxu0 0
      %919 = vmatpush2.bf16.msra.mxu0 0
      %920 = vmatprep.subr.bf16.mxu0 0
      %921 = vmatpush2.bf16.msra.mxu0 0
      %922 = vmatprep.subr.bf16.mxu0 0
      %923 = vmatpush2.bf16.msra.mxu0 0
      %924 = vmatprep.subr.bf16.mxu0 0
      %925 = vmatpush2.bf16.msra.mxu0 0
      %926 = vmatprep.subr.bf16.mxu0 0
      %927 = vmatpush2.bf16.msra.mxu0 0
      %928 = vmatprep.subr.bf16.mxu0 0
      %929 = vmatpush2.bf16.msra.mxu0 0
      %930 = vmatprep.subr.bf16.mxu0 0
      %931 = vmatpush2.bf16.msra.mxu0 0
      %932 = vmatprep.subr.bf16.mxu0 0
      %933 = vmatpush2.bf16.msra.mxu0 0
      %934 = vmatprep.mubr.bf16.mxu0 0
      %935 = vmatmul.mubr.bf16.gmra.mxu0 %v897
      %v936 = vpop.f32.mrf.mxu0
      %v937 = vadd.f32 0.0, %v936
      %v938 = vpop.f32.mrf.mxu0
      %v939 = vpop.f32.mrf.mxu0
      %v940 = vpop.f32.mrf.mxu0
      %941 = vdwg.mxu0
      %942 = vrot.lane.b32.xlu0 %v718, 112
      %v943 = vpop.permute.xlu0 %942
      %944 = vrot.lane.b32.xlu0 %v719, 80
      %v945 = vpop.permute.xlu0 %944
      %v947 = vsel %vm723, %v943, 0
      %v950 = vsel %vm723, %v945, 0
      %952 = vmatprep.subr.bf16.mxu0 0
      %953 = vmatpush1.bf16.xpose.msra.mxu0 0
      %954 = vmatprep.subr.bf16.mxu0 0
      %955 = vmatpush1.bf16.xpose.msra.mxu0 0
      %956 = vmatprep.subr.bf16.mxu0 0
      %957 = vmatpush1.bf16.xpose.msra.mxu0 0
      %958 = vmatprep.subr.bf16.mxu0 0
      %959 = vmatpush1.bf16.xpose.msra.mxu0 0
      %960 = vmatprep.subr.bf16.mxu0 0
      %961 = vmatpush1.bf16.xpose.msra.mxu0 0
      %962 = vmatprep.subr.bf16.mxu0 0
      %963 = vmatpush1.bf16.xpose.msra.mxu0 0
      %964 = vmatprep.subr.bf16.mxu0 0
      %965 = vmatpush1.bf16.xpose.msra.mxu0 0
      %966 = vmatprep.subr.bf16.mxu0 0
      %967 = vmatpush1.bf16.xpose.msra.mxu0 %v950
      %968 = vmatprep.subr.bf16.mxu0 0
      %969 = vmatpush2.bf16.xpose.msra.mxu0 0
      %970 = vmatprep.subr.bf16.mxu0 0
      %971 = vmatpush2.bf16.xpose.msra.mxu0 0
      %972 = vmatprep.subr.bf16.mxu0 0
      %973 = vmatpush2.bf16.xpose.msra.mxu0 0
      %974 = vmatprep.subr.bf16.mxu0 0
      %975 = vmatpush2.bf16.xpose.msra.mxu0 0
      %976 = vmatprep.subr.bf16.mxu0 0
      %977 = vmatpush2.bf16.xpose.msra.mxu0 0
      %978 = vmatprep.subr.bf16.mxu0 0
      %979 = vmatpush2.bf16.xpose.msra.mxu0 0
      %980 = vmatprep.subr.bf16.mxu0 0
      %981 = vmatpush2.bf16.xpose.msra.mxu0 0
      %982 = vmatprep.subr.bf16.mxu0 0
      %983 = vmatpush2.bf16.xpose.msra.mxu0 0
      %984 = vmatprep.mubr.bf16.mxu0 0
      %985 = vmatmul.mubr.bf16.gmra.mxu0 %v947
      %v986 = vpop.f32.mrf.mxu0
      %v987 = vadd.f32 0.0, %v986
      %v988 = vpop.f32.mrf.mxu0
      %v989 = vpop.f32.mrf.mxu0
      %v990 = vpop.f32.mrf.mxu0
      %991 = vdwg.mxu0
      %v992 = vsel %vm723, %v987, -inf
      %993 = vmax.xlane.f32.xlu0 %v992
      %v994 = vpop.xlane.xlu0 %993
      %v995 = vsub.f32 %v987, %v994
      %v996 = vmul.f32 %v995, 1.442695
      %v997 = vpow.pop %v996
      %v998 = vsel %vm723, %v997, 0.0
      %999 = vadd.xlane.f32.xlu0 %v998
      %v1000 = vpop.xlane.xlu0 %999
      %v1001 = vrcp.pop %v1000
      %v1002 = vmul.f32 %v997, %v1001
      %v1003 = vpack.c.bf16 %v1002, %v1002
      %1004 = vrot.lane.b32.xlu0 %v719, 48
      %v1005 = vpop.permute.xlu0 %1004
      %v1007 = vsel %vm723, %v1003, 0
      %v1010 = vsel %vm787, %v1005, 0
      %1012 = vmatprep.subr.bf16.mxu0 0
      %1013 = vmatpush1.bf16.msra.mxu0 0
      %1014 = vmatprep.subr.bf16.mxu0 0
      %1015 = vmatpush1.bf16.msra.mxu0 0
      %1016 = vmatprep.subr.bf16.mxu0 0
      %1017 = vmatpush1.bf16.msra.mxu0 0
      %1018 = vmatprep.subr.bf16.mxu0 0
      %1019 = vmatpush1.bf16.msra.mxu0 0
      %1020 = vmatprep.subr.bf16.mxu0 0
      %1021 = vmatpush1.bf16.msra.mxu0 0
      %1022 = vmatprep.subr.bf16.mxu0 0
      %1023 = vmatpush1.bf16.msra.mxu0 0
      %1024 = vmatprep.subr.bf16.mxu0 0
      %1025 = vmatpush1.bf16.msra.mxu0 0
      %1026 = vmatprep.subr.bf16.mxu0 0
      %1027 = vmatpush1.bf16.msra.mxu0 %v1010
      %1028 = vmatprep.subr.bf16.mxu0 0
      %1029 = vmatpush2.bf16.msra.mxu0 0
      %1030 = vmatprep.subr.bf16.mxu0 0
      %1031 = vmatpush2.bf16.msra.mxu0 0
      %1032 = vmatprep.subr.bf16.mxu0 0
      %1033 = vmatpush2.bf16.msra.mxu0 0
      %1034 = vmatprep.subr.bf16.mxu0 0
      %1035 = vmatpush2.bf16.msra.mxu0 0
      %1036 = vmatprep.subr.bf16.mxu0 0
      %1037 = vmatpush2.bf16.msra.mxu0 0
      %1038 = vmatprep.subr.bf16.mxu0 0
      %1039 = vmatpush2.bf16.msra.mxu0 0
      %1040 = vmatprep.subr.bf16.mxu0 0
      %1041 = vmatpush2.bf16.msra.mxu0 0
      %1042 = vmatprep.subr.bf16.mxu0 0
      %1043 = vmatpush2.bf16.msra.mxu0 0
      %1044 = vmatprep.mubr.bf16.mxu0 0
      %1045 = vmatmul.mubr.bf16.gmra.mxu0 %v1007
      %v1046 = vpop.f32.mrf.mxu0
      %v1047 = vadd.f32 0.0, %v1046
      %v1048 = vpop.f32.mrf.mxu0
      %v1049 = vpop.f32.mrf.mxu0
      %v1050 = vpop.f32.mrf.mxu0
      %1051 = vdwg.mxu0
      %1052 = vrot.lane.b32.xlu0 %v718, 104
      %v1053 = vpop.permute.xlu0 %1052
      %1054 = vrot.lane.b32.xlu0 %v719, 72
      %v1055 = vpop.permute.xlu0 %1054
      %v1057 = vsel %vm723, %v1053, 0
      %v1060 = vsel %vm723, %v1055, 0
      %1062 = vmatprep.subr.bf16.mxu0 0
      %1063 = vmatpush1.bf16.xpose.msra.mxu0 0
      %1064 = vmatprep.subr.bf16.mxu0 0
      %1065 = vmatpush1.bf16.xpose.msra.mxu0 0
      %1066 = vmatprep.subr.bf16.mxu0 0
      %1067 = vmatpush1.bf16.xpose.msra.mxu0 0
      %1068 = vmatprep.subr.bf16.mxu0 0
      %1069 = vmatpush1.bf16.xpose.msra.mxu0 0
      %1070 = vmatprep.subr.bf16.mxu0 0
      %1071 = vmatpush1.bf16.xpose.msra.mxu0 0
      %1072 = vmatprep.subr.bf16.mxu0 0
      %1073 = vmatpush1.bf16.xpose.msra.mxu0 0
      %1074 = vmatprep.subr.bf16.mxu0 0
      %1075 = vmatpush1.bf16.xpose.msra.mxu0 0
      %1076 = vmatprep.subr.bf16.mxu0 0
      %1077 = vmatpush1.bf16.xpose.msra.mxu0 %v1060
      %1078 = vmatprep.subr.bf16.mxu0 0
      %1079 = vmatpush2.bf16.xpose.msra.mxu0 0
      %1080 = vmatprep.subr.bf16.mxu0 0
      %1081 = vmatpush2.bf16.xpose.msra.mxu0 0
      %1082 = vmatprep.subr.bf16.mxu0 0
      %1083 = vmatpush2.bf16.xpose.msra.mxu0 0
      %1084 = vmatprep.subr.bf16.mxu0 0
      %1085 = vmatpush2.bf16.xpose.msra.mxu0 0
      %1086 = vmatprep.subr.bf16.mxu0 0
      %1087 = vmatpush2.bf16.xpose.msra.mxu0 0
      %1088 = vmatprep.subr.bf16.mxu0 0
      %1089 = vmatpush2.bf16.xpose.msra.mxu0 0
      %1090 = vmatprep.subr.bf16.mxu0 0
      %1091 = vmatpush2.bf16.xpose.msra.mxu0 0
      %1092 = vmatprep.subr.bf16.mxu0 0
      %1093 = vmatpush2.bf16.xpose.msra.mxu0 0
      %1094 = vmatprep.mubr.bf16.mxu0 0
      %1095 = vmatmul.mubr.bf16.gmra.mxu0 %v1057
      %v1096 = vpop.f32.mrf.mxu0
      %v1097 = vadd.f32 0.0, %v1096
      %v1098 = vpop.f32.mrf.mxu0
      %v1099 = vpop.f32.mrf.mxu0
      %v1100 = vpop.f32.mrf.mxu0
      %1101 = vdwg.mxu0
      %v1102 = vsel %vm723, %v1097, -inf
      %1103 = vmax.xlane.f32.xlu0 %v1102
      %v1104 = vpop.xlane.xlu0 %1103
      %v1105 = vsub.f32 %v1097, %v1104
      %v1106 = vmul.f32 %v1105, 1.442695
      %v1107 = vpow.pop %v1106
      %v1108 = vsel %vm723, %v1107, 0.0
      %1109 = vadd.xlane.f32.xlu0 %v1108
      %v1110 = vpop.xlane.xlu0 %1109
      %v1111 = vrcp.pop %v1110
      %v1112 = vmul.f32 %v1107, %v1111
      %v1113 = vpack.c.bf16 %v1112, %v1112
      %1114 = vrot.lane.b32.xlu0 %v719, 40
      %v1115 = vpop.permute.xlu0 %1114
      %v1117 = vsel %vm723, %v1113, 0
      %v1120 = vsel %vm787, %v1115, 0
      %1122 = vmatprep.subr.bf16.mxu0 0
      %1123 = vmatpush1.bf16.msra.mxu0 0
      %1124 = vmatprep.subr.bf16.mxu0 0
      %1125 = vmatpush1.bf16.msra.mxu0 0
      %1126 = vmatprep.subr.bf16.mxu0 0
      %1127 = vmatpush1.bf16.msra.mxu0 0
      %1128 = vmatprep.subr.bf16.mxu0 0
      %1129 = vmatpush1.bf16.msra.mxu0 0
      %1130 = vmatprep.subr.bf16.mxu0 0
      %1131 = vmatpush1.bf16.msra.mxu0 0
      %1132 = vmatprep.subr.bf16.mxu0 0
      %1133 = vmatpush1.bf16.msra.mxu0 0
      %1134 = vmatprep.subr.bf16.mxu0 0
      %1135 = vmatpush1.bf16.msra.mxu0 0
      %1136 = vmatprep.subr.bf16.mxu0 0
      %1137 = vmatpush1.bf16.msra.mxu0 %v1120
      %1138 = vmatprep.subr.bf16.mxu0 0
      %1139 = vmatpush2.bf16.msra.mxu0 0
      %1140 = vmatprep.subr.bf16.mxu0 0
      %1141 = vmatpush2.bf16.msra.mxu0 0
      %1142 = vmatprep.subr.bf16.mxu0 0
      %1143 = vmatpush2.bf16.msra.mxu0 0
      %1144 = vmatprep.subr.bf16.mxu0 0
      %1145 = vmatpush2.bf16.msra.mxu0 0
      %1146 = vmatprep.subr.bf16.mxu0 0
      %1147 = vmatpush2.bf16.msra.mxu0 0
      %1148 = vmatprep.subr.bf16.mxu0 0
      %1149 = vmatpush2.bf16.msra.mxu0 0
      %1150 = vmatprep.subr.bf16.mxu0 0
      %1151 = vmatpush2.bf16.msra.mxu0 0
      %1152 = vmatprep.subr.bf16.mxu0 0
      %1153 = vmatpush2.bf16.msra.mxu0 0
      %1154 = vmatprep.mubr.bf16.mxu0 0
      %1155 = vmatmul.mubr.bf16.gmra.mxu0 %v1117
      %v1156 = vpop.f32.mrf.mxu0
      %v1157 = vadd.f32 0.0, %v1156
      %v1158 = vpop.f32.mrf.mxu0
      %v1159 = vpop.f32.mrf.mxu0
      %v1160 = vpop.f32.mrf.mxu0
      %1161 = vdwg.mxu0
      %1163 = vrot.lane.b32.xlu0 %v937, 8
      %v1164 = vpop.permute.xlu0 %1163
      %1167 = vrot.lane.b32.xlu0 %v1047, 16
      %v1168 = vpop.permute.xlu0 %1167
      %1171 = vrot.lane.b32.xlu0 %v1157, 24
      %v1172 = vpop.permute.xlu0 %1171
      %v1174 = vsel %vm723, %v826, %v1164
      %vm1175 = vcmask 130048
      %v1176 = vsel %vm1175, %v1174, %v1168
      %vm1177 = vcmask 195584
      %v1178 = vsel %vm1177, %v1176, %v1172
      %v1179 = vpack.c.bf16 %v1178, %v1178
      %v1180 = vld [vmem:[%s604] sm:$0xf]
      %v1181 = vld [vmem:[%s604 + $0x4] sm:$0xf]
      %v1182 = vld [vmem:[%s604 + $0x8] sm:$0xf]
      %v1183 = vld [vmem:[%s604 + $0xc] sm:$0xf]
      %v1184 = vld [vmem:[%s607] sm:$0x1]
      %v1186 = vlaneseq
      %v1187 = vshrl.u32 %v1186, 7
      %v1188 = vsub.s32 0, %v1187
      %v1189 = vrot.slane %v1184, %v1188
      %v1195 = vunpack.c.l.b16 %v1180
      %v1196 = vunpack.c.l.b16 %v1181
      %v1197 = vunpack.c.l.b16 %v1182
      %v1198 = vunpack.c.l.b16 %v1183
      %v1199 = vpack.c.b16 %v1196, %v1195
      %v1200 = vpack.c.b16 %v1198, %v1197
      %v1204 = vsel %vm673, %v1179, 0
      %1206 = vmatprep.subr.bf16.mxu0 0
      %1207 = vmatpush1.bf16.msra.mxu0 0
      %1208 = vmatprep.subr.bf16.mxu0 0
      %1209 = vmatpush1.bf16.msra.mxu0 0
      %1210 = vmatprep.subr.bf16.mxu0 0
      %1211 = vmatpush1.bf16.msra.mxu0 0
      %1212 = vmatprep.subr.bf16.mxu0 0
      %1213 = vmatpush1.bf16.msra.mxu0 0
      %1214 = vmatprep.subr.bf16.mxu0 0
      %1215 = vmatpush1.bf16.msra.mxu0 0
      %1216 = vmatprep.subr.bf16.mxu0 0
      %1217 = vmatpush1.bf16.msra.mxu0 0
      %1218 = vmatprep.subr.bf16.mxu0 0
      %1219 = vmatpush1.bf16.msra.mxu0 %v1200
      %1220 = vmatprep.subr.bf16.mxu0 0
      %1221 = vmatpush1.bf16.msra.mxu0 %v1199
      %1222 = vmatprep.subr.bf16.mxu0 0
      %1223 = vmatpush2.bf16.msra.mxu0 0
      %1224 = vmatprep.subr.bf16.mxu0 0
      %1225 = vmatpush2.bf16.msra.mxu0 0
      %1226 = vmatprep.subr.bf16.mxu0 0
      %1227 = vmatpush2.bf16.msra.mxu0 0
      %1228 = vmatprep.subr.bf16.mxu0 0
      %1229 = vmatpush2.bf16.msra.mxu0 0
      %1230 = vmatprep.subr.bf16.mxu0 0
      %1231 = vmatpush2.bf16.msra.mxu0 0
      %1232 = vmatprep.subr.bf16.mxu0 0
      %1233 = vmatpush2.bf16.msra.mxu0 0
      %1234 = vmatprep.subr.bf16.mxu0 0
      %1235 = vmatpush2.bf16.msra.mxu0 0
      %1236 = vmatprep.subr.bf16.mxu0 0
      %1237 = vmatpush2.bf16.msra.mxu0 0
      %1238 = vmatprep.mubr.bf16.mxu0 0
      %1239 = vmatmul.mubr.bf16.gmra.mxu0 %v1204
      %v1240 = vpop.f32.mrf.mxu0
      %v1241 = vadd.f32 %v1189, %v1240
      %v1242 = vpop.f32.mrf.mxu0
      %v1243 = vpop.f32.mrf.mxu0
      %v1244 = vpop.f32.mrf.mxu0
      %1245 = vdwg.mxu0
      %v1246 = vadd.f32 %v648, %v1241
      %v1247 = vsel %vm673, %v1246, 0.0
      %1248 = vadd.xlane.f32.xlu0 %v1247
      %v1249 = vpop.xlane.xlu0 %1248
      %v1250 = vrcp.pop 32.0
      %v1251 = vmul.f32 %v1249, %v1250
      %v1252 = vsub.f32 %v1246, %v1251
      %v1253 = vmul.f32 %v1252, %v1252
      %v1254 = vsel %vm673, %v1253, 0.0
      %1255 = vadd.xlane.f32.xlu0 %v1254
      %v1256 = vpop.xlane.xlu0 %1255
      %v1257 = vmul.f32 %v1256, %v1250
      %v1258 = vadd.f32 %v1257, 1e-05
      %v1259 = vrsqrt.pop %v1258
      %v1260 = vmul.f32 %v1252, %v1259
      %v1261 = vld [vmem:[%s610] sm:$0x1]
      %v1263 = vlaneseq
      %v1264 = vshrl.u32 %v1263, 7
      %v1265 = vsub.s32 0, %v1264
      %v1266 = vrot.slane %v1261, %v1265
      %v1268 = vmul.f32 %v1260, %v1266
      %v1269 = vld [vmem:[%s613] sm:$0x1]
      %v1271 = vlaneseq
      %v1272 = vshrl.u32 %v1271, 7
      %v1273 = vsub.s32 0, %v1272
      %v1274 = vrot.slane %v1269, %v1273
      %v1276 = vadd.f32 %v1268, %v1274
      %v1277 = vpack.c.bf16 %v1276, %v1276
      %v1278 = vld [vmem:[%s618] sm:$0xf]
      %v1279 = vld [vmem:[%s618 + $0x4] sm:$0xf]
      %v1280 = vld [vmem:[%s618 + $0x8] sm:$0xf]
      %v1281 = vld [vmem:[%s618 + $0xc] sm:$0xf]
      %v1282 = vld [vmem:[%s621] sm:$0x1]
      %v1284 = vlaneseq
      %v1285 = vshrl.u32 %v1284, 7
      %v1286 = vsub.s32 0, %v1285
      %v1287 = vrot.slane %v1282, %v1286
      %v1293 = vunpack.c.l.b16 %v1278
      %v1294 = vunpack.c.l.b16 %v1279
      %v1295 = vunpack.c.l.b16 %v1280
      %v1296 = vunpack.c.l.b16 %v1281
      %v1297 = vpack.c.b16 %v1294, %v1293
      %v1298 = vpack.c.b16 %v1296, %v1295
      %v1302 = vsel %vm673, %v1277, 0
      %1304 = vmatprep.subr.bf16.mxu0 0
      %1305 = vmatpush1.bf16.msra.mxu0 0
      %1306 = vmatprep.subr.bf16.mxu0 0
      %1307 = vmatpush1.bf16.msra.mxu0 0
      %1308 = vmatprep.subr.bf16.mxu0 0
      %1309 = vmatpush1.bf16.msra.mxu0 0
      %1310 = vmatprep.subr.bf16.mxu0 0
      %1311 = vmatpush1.bf16.msra.mxu0 0
      %1312 = vmatprep.subr.bf16.mxu0 0
      %1313 = vmatpush1.bf16.msra.mxu0 0
      %1314 = vmatprep.subr.bf16.mxu0 0
      %1315 = vmatpush1.bf16.msra.mxu0 0
      %1316 = vmatprep.subr.bf16.mxu0 0
      %1317 = vmatpush1.bf16.msra.mxu0 %v1298
      %1318 = vmatprep.subr.bf16.mxu0 0
      %1319 = vmatpush1.bf16.msra.mxu0 %v1297
      %1320 = vmatprep.subr.bf16.mxu0 0
      %1321 = vmatpush2.bf16.msra.mxu0 0
      %1322 = vmatprep.subr.bf16.mxu0 0
      %1323 = vmatpush2.bf16.msra.mxu0 0
      %1324 = vmatprep.subr.bf16.mxu0 0
      %1325 = vmatpush2.bf16.msra.mxu0 0
      %1326 = vmatprep.subr.bf16.mxu0 0
      %1327 = vmatpush2.bf16.msra.mxu0 0
      %1328 = vmatprep.subr.bf16.mxu0 0
      %1329 = vmatpush2.bf16.msra.mxu0 0
      %1330 = vmatprep.subr.bf16.mxu0 0
      %1331 = vmatpush2.bf16.msra.mxu0 0
      %1332 = vmatprep.subr.bf16.mxu0 0
      %1333 = vmatpush2.bf16.msra.mxu0 0
      %1334 = vmatprep.subr.bf16.mxu0 0
      %1335 = vmatpush2.bf16.msra.mxu0 0
      %1336 = vmatprep.mubr.bf16.mxu0 0
      %1337 = vmatmul.mubr.bf16.gmra.mxu0 %v1302
      %v1338 = vpop.f32.mrf.mxu0
      %v1339 = vadd.f32 %v1287, %v1338
      %v1340 = vpop.f32.mrf.mxu0
      %v1341 = vpop.f32.mrf.mxu0
      %v1342 = vpop.f32.mrf.mxu0
      %1343 = vdwg.mxu0
      %v1344 = vmax.f32 %v1339, 0.0
      %v1345 = vpack.c.bf16 %v1344, %v1344
      %v1346 = vld [vmem:[%s626] sm:$0xf]
      %v1347 = vld [vmem:[%s626 + $0x4] sm:$0xf]
      %v1348 = vld [vmem:[%s626 + $0x8] sm:$0xf]
      %v1349 = vld [vmem:[%s626 + $0xc] sm:$0xf]
      %v1350 = vld [vmem:[%s626 + $0x10] sm:$0xf]
      %v1351 = vld [vmem:[%s626 + $0x14] sm:$0xf]
      %v1352 = vld [vmem:[%s626 + $0x18] sm:$0xf]
      %v1353 = vld [vmem:[%s626 + $0x1c] sm:$0xf]
      %v1354 = vld [vmem:[%s626 + $0x20] sm:$0xf]
      %v1355 = vld [vmem:[%s626 + $0x24] sm:$0xf]
      %v1356 = vld [vmem:[%s626 + $0x28] sm:$0xf]
      %v1357 = vld [vmem:[%s626 + $0x2c] sm:$0xf]
      %v1358 = vld [vmem:[%s626 + $0x30] sm:$0xf]
      %v1359 = vld [vmem:[%s626 + $0x34] sm:$0xf]
      %v1360 = vld [vmem:[%s626 + $0x38] sm:$0xf]
      %v1361 = vld [vmem:[%s626 + $0x3c] sm:$0xf]
      %v1362 = vld [vmem:[%s629] sm:$0x1]
      %v1364 = vlaneseq
      %v1365 = vshrl.u32 %v1364, 7
      %v1366 = vsub.s32 0, %v1365
      %v1367 = vrot.slane %v1362, %v1366
      %v1385 = vunpack.c.l.b16 %v1346
      %v1386 = vunpack.c.l.b16 %v1347
      %v1387 = vunpack.c.l.b16 %v1348
      %v1388 = vunpack.c.l.b16 %v1349
      %v1389 = vunpack.c.l.b16 %v1350
      %v1390 = vunpack.c.l.b16 %v1351
      %v1391 = vunpack.c.l.b16 %v1352
      %v1392 = vunpack.c.l.b16 %v1353
      %v1393 = vunpack.c.l.b16 %v1354
      %v1394 = vunpack.c.l.b16 %v1355
      %v1395 = vunpack.c.l.b16 %v1356
      %v1396 = vunpack.c.l.b16 %v1357
      %v1397 = vunpack.c.l.b16 %v1358
      %v1398 = vunpack.c.l.b16 %v1359
      %v1399 = vunpack.c.l.b16 %v1360
      %v1400 = vunpack.c.l.b16 %v1361
      %v1401 = vpack.c.b16 %v1386, %v1385
      %v1402 = vpack.c.b16 %v1388, %v1387
      %v1403 = vpack.c.b16 %v1390, %v1389
      %v1404 = vpack.c.b16 %v1392, %v1391
      %v1405 = vpack.c.b16 %v1394, %v1393
      %v1406 = vpack.c.b16 %v1396, %v1395
      %v1407 = vpack.c.b16 %v1398, %v1397
      %v1408 = vpack.c.b16 %v1400, %v1399
      %1417 = vmatprep.subr.bf16.mxu0 0
      %1418 = vmatpush1.bf16.msra.mxu0 %v1408
      %1419 = vmatprep.subr.bf16.mxu0 0
      %1420 = vmatpush1.bf16.msra.mxu0 %v1407
      %1421 = vmatprep.subr.bf16.mxu0 0
      %1422 = vmatpush1.bf16.msra.mxu0 %v1406
      %1423 = vmatprep.subr.bf16.mxu0 0
      %1424 = vmatpush1.bf16.msra.mxu0 %v1405
      %1425 = vmatprep.subr.bf16.mxu0 0
      %1426 = vmatpush1.bf16.msra.mxu0 %v1404
      %1427 = vmatprep.subr.bf16.mxu0 0
      %1428 = vmatpush1.bf16.msra.mxu0 %v1403
      %1429 = vmatprep.subr.bf16.mxu0 0
      %1430 = vmatpush1.bf16.msra.mxu0 %v1402
      %1431 = vmatprep.subr.bf16.mxu0 0
      %1432 = vmatpush1.bf16.msra.mxu0 %v1401
      %1433 = vmatprep.subr.bf16.mxu0 0
      %1434 = vmatpush2.bf16.msra.mxu0 0
      %1435 = vmatprep.subr.bf16.mxu0 0
      %1436 = vmatpush2.bf16.msra.mxu0 0
      %1437 = vmatprep.subr.bf16.mxu0 0
      %1438 = vmatpush2.bf16.msra.mxu0 0
      %1439 = vmatprep.subr.bf16.mxu0 0
      %1440 = vmatpush2.bf16.msra.mxu0 0
      %1441 = vmatprep.subr.bf16.mxu0 0
      %1442 = vmatpush2.bf16.msra.mxu0 0
      %1443 = vmatprep.subr.bf16.mxu0 0
      %1444 = vmatpush2.bf16.msra.mxu0 0
      %1445 = vmatprep.subr.bf16.mxu0 0
      %1446 = vmatpush2.bf16.msra.mxu0 0
      %1447 = vmatprep.subr.bf16.mxu0 0
      %1448 = vmatpush2.bf16.msra.mxu0 0
      %1449 = vmatprep.mubr.bf16.mxu0 0
      %1450 = vmatmul.mubr.bf16.gmra.mxu0 %v1345
      %v1451 = vpop.f32.mrf.mxu0
      %v1452 = vadd.f32 %v1367, %v1451
      %v1453 = vpop.f32.mrf.mxu0
      %v1454 = vpop.f32.mrf.mxu0
      %v1455 = vpop.f32.mrf.mxu0
      %1456 = vdwg.mxu0
      %v1457 = vadd.f32 %v1276, %v1452
      %v1458 = vsel %vm673, %v1457, 0.0
      %1459 = vadd.xlane.f32.xlu0 %v1458
      %v1460 = vpop.xlane.xlu0 %1459
      %v1461 = vmul.f32 %v1460, %v1250
      %v1462 = vsub.f32 %v1457, %v1461
      %v1463 = vmul.f32 %v1462, %v1462
      %v1464 = vsel %vm673, %v1463, 0.0
      %1465 = vadd.xlane.f32.xlu0 %v1464
      %v1466 = vpop.xlane.xlu0 %1465
      %v1467 = vmul.f32 %v1466, %v1250
      %v1468 = vadd.f32 %v1467, 1e-05
      %v1469 = vrsqrt.pop %v1468
      %v1470 = vmul.f32 %v1462, %v1469
      %v1471 = vld [vmem:[%s632] sm:$0x1]
      %v1473 = vlaneseq
      %v1474 = vshrl.u32 %v1473, 7
      %v1475 = vsub.s32 0, %v1474
      %v1476 = vrot.slane %v1471, %v1475
      %v1478 = vmul.f32 %v1470, %v1476
      %v1479 = vld [vmem:[%s635] sm:$0x1]
      %v1481 = vlaneseq
      %v1482 = vshrl.u32 %v1481, 7
      %v1483 = vsub.s32 0, %v1482
      %v1484 = vrot.slane %v1479, %v1483
      %v1486 = vadd.f32 %v1478, %v1484
      %1487 = vst.msk [vmem:[#allocation2] sm:$0xff] %vm673, %v1486
      %p1488 = scmp.eq.s32.totalorder %s29, 1
      // Predicated region
      $region77: #{transformer_forward.4} parent=71 // pred_check
        %p1489 = pneg %p1488
      $region78: #{transformer_forward.4} parent=71 // pred_check_branch
        %1491 = sbr.rel (%p1489) target = $region80
      $region79: #{transformer_forward.4} parent=71 // pred_region
        %1492 = vst.msk [vmem:[%s639] sm:$0xff] %vm673, %v1486
      $region80: #{transformer_forward.4} parent=71 // pred_fallthru
        _
      %p1493 = scmp.lt.s32.totalorder %s28, 1
      %s1494 = scalar_select %p1493, %s28, 1
      %s1495 = smul.addr %s1494, 8
      %s1496 = scalar_lea.vmem %s13, %s1495
      // Predicated region
      $region81: #{transformer_forward.4} parent=71 // pred_check
        %p1497 = pneg %p392
      $region82: #{transformer_forward.4} parent=71 // pred_check_branch
        %1499 = sbr.rel (%p1497) target = $region84
      $region83: #{transformer_forward.4} parent=71 // pred_region
        _
      $region84: #{transformer_forward.4} parent=71 // pred_fallthru
        _
    $region72: #{transformer_forward.4} parent=5 // pred_fallthru
      _
    %p1500 = scmp.le.s32.totalorder 2, %s19
    // Predicated region
    $region85: #{transformer_forward.4} parent=5 // pred_check
      %p1501 = pneg %p1500
    $region86: #{transformer_forward.4} parent=5 // pred_check_branch
      %1503 = sbr.rel (%p1501) target = $region88
    $region87: #{transformer_forward.4} parent=5 // pred_region
      %s1504 = ssub.s32 %s19, 2
      // Predicated region
      $region89: #{transformer_forward.4} parent=87 // pred_check
        %p1505 = pneg %p398
      $region90: #{transformer_forward.4} parent=87 // pred_check_branch
        %1507 = sbr.rel (%p1505) target = $region92
      $region91: #{transformer_forward.4} parent=87 // pred_region
        %p1508 = scmp.lt.s32.totalorder %s30, 1
        %s1509 = scalar_select %p1508, %s30, 1
        %s1510 = smul.addr %s1509, 8
        %s1511 = scalar_lea.vmem %s13, %s1510
      $region92: #{transformer_forward.4} parent=87 // pred_fallthru
        _
    $region88: #{transformer_forward.4} parent=5 // pred_fallthru
      _
  $region6: #{transformer_forward.4} parent=0 // loop_footer
    %s23 = sadd.s32 1, %s19
  $region7: #{transformer_forward.4} parent=0 // loop_footer_branch
    %18 = sbr.rel target = $region3
  $region8: #{transformer_forward.4} parent=0 // loop_exit
    _

</llo_original>
